<compile_context>
chip_gen: v7x
topology: tpu7x:2x2x1
jax: 0.10.0
libtpu: 0.0.40
codegen_flags: <defaults>
</compile_context>

<pallas_src>
import math
from functools import partial

import jax
import jax.numpy as jnp
from jax import lax
from jax.experimental import pallas as pl
from jax.experimental.pallas import tpu as pltpu

_LN_EPS = 1e-6
_MIB = 1 << 20


def _round_up(x, m):
    return (x + m - 1) // m * m


def _vmem_cap_bytes():
    """Physical VMEM per core, per generation (128 MiB v5e/v6e, 64 MiB v7x)."""
    try:
        cap = getattr(pltpu.get_tpu_info(), "vmem_capacity_bytes", None)
        if cap:
            return int(cap)
    except Exception:
        pass
    return 64 * _MIB  # conservative fallback valid on every generation


def _vmem_limit(*byte_counts):
    need = int(sum(byte_counts)) + 4 * _MIB
    cap = max(int(0.85 * _vmem_cap_bytes()), 32 * _MIB)
    return int(min(max(need, 32 * _MIB), cap))


def _const_spec(block_shape, index_map):
    """BlockSpec for grid-invariant operands (weights/biases): single-buffered."""
    if hasattr(pl, "Buffered"):
        try:
            return pl.BlockSpec(block_shape, index_map, pipeline_mode=pl.Buffered(1))
        except TypeError:  # older jax without pipeline_mode support
            pass
    return pl.BlockSpec(block_shape, index_map)


def _ln_f32(x_f32, gamma_f32, beta_f32, eps=_LN_EPS):
    """Module's custom LayerNorm: unbiased std (N-1), eps added to the std."""
    n = x_f32.shape[-1]
    mean = jnp.mean(x_f32, axis=-1, keepdims=True)
    var = jnp.sum(jnp.square(x_f32 - mean), axis=-1, keepdims=True) / (n - 1)
    std = jnp.sqrt(var)
    return gamma_f32 * (x_f32 - mean) / (std + eps) + beta_f32


# -----------------------------------------------------------------------------
# Attention block kernel: y = x + Wo @ MHA(LN1(x)) + bo     (per-batch grid step)
# -----------------------------------------------------------------------------
def _attn_block_kernel(x_ref, g1_ref, b1_ref, wqkv_ref, wo_ref, bo_ref, o_ref,
                       *, num_heads):
    x = x_ref[0]                                          # (S, E)
    xf = x.astype(jnp.float32)
    S, E = xf.shape
    hd = E // num_heads
    mxu_dtype = wqkv_ref.dtype
    exact = mxu_dtype == jnp.float32

    xn = _ln_f32(xf, g1_ref[...].astype(jnp.float32), b1_ref[...].astype(jnp.float32))
    xn = xn.astype(mxu_dtype)                             # bf16 MXU operand

    # qkv projection (qkv_bias=False). Wq columns were pre-scaled by 1/sqrt(hd)
    # in the wrapper, so no (S,S) score scaling is needed below.
    qkv = jnp.dot(xn, wqkv_ref[...], preferred_element_type=jnp.float32)   # (S, 3E) f32

    acc = jnp.zeros((S, E), jnp.float32)                  # out-projection accumulator
    for h in range(num_heads):                            # static loop; acc-only carry
        q = qkv[:, h * hd:(h + 1) * hd].astype(mxu_dtype)
        k = qkv[:, E + h * hd:E + (h + 1) * hd].astype(mxu_dtype)
        v = qkv[:, 2 * E + h * hd:2 * E + (h + 1) * hd].astype(mxu_dtype)
        # contract head_dim directly -> no materialized k.T relayout
        s = lax.dot_general(q, k, dimension_numbers=(((1,), (1,)), ((), ())),
                            preferred_element_type=jnp.float32)            # (S, S)
        s = s - jnp.max(s, axis=-1, keepdims=True)
        p = jnp.exp(s)
        denom = jnp.sum(p, axis=-1, keepdims=True)
        if exact:
            p = p / denom                                  # exact-f32 path
        else:
            p = p * pl.reciprocal(denom, approx=True)      # EUP slot; VALU stays free
        head_out = jnp.dot(p.astype(mxu_dtype), v, preferred_element_type=jnp.float32)
        # accumulate this head's slice of the output projection (no concat)
        acc = acc + jnp.dot(head_out.astype(mxu_dtype),
                            wo_ref[h * hd:(h + 1) * hd, :],
                            preferred_element_type=jnp.float32)

    y = acc + bo_ref[...].astype(jnp.float32)
    o_ref[0] = (xf + y).astype(o_ref.dtype)


def attention_block(x, g1, b1, wqkv, wo, bo, *, num_heads, mxu_dtype=jnp.bfloat16):
    B, S, E = x.shape
    assert E % num_heads == 0, "embed_dim must be divisible by num_heads"
    hd = E // num_heads
    x_it = jnp.dtype(x.dtype).itemsize
    w_it = jnp.dtype(mxu_dtype).itemsize

    # Fold the 1/sqrt(head_dim) attention scale into the Wq columns (free), and
    # convert the MXU weights once to the compute dtype (bf16 by default).
    wqkv_f = wqkv.astype(jnp.float32)
    wqkv_c = jnp.concatenate(
        [wqkv_f[:, :E] * jnp.float32(1.0 / math.sqrt(hd)), wqkv_f[:, E:]],
        axis=1).astype(mxu_dtype)
    wo_c = wo.astype(mxu_dtype)

    g1_2d = g1.reshape(1, E)
    b1_2d = b1.reshape(1, E)
    bo_2d = bo.reshape(1, E)

    flops = (2 * B * S * E * 3 * E          # qkv projection
             + 4 * B * num_heads * S * S * hd  # scores + attn@v
             + 2 * B * S * E * E)           # out projection
    w_bytes = (wqkv_c.size + wo_c.size) * w_it
    bytes_accessed = w_bytes + 2 * x.size * x_it
    vmem = _vmem_limit(
        w_bytes,                            # single-buffered weights (Buffered(1))
        4 * S * E * x_it,                   # double-buffered x / out tiles
        4 * (5 * S * E + 2 * S * S),        # f32 in-kernel intermediates
    )

    return pl.pallas_call(
        partial(_attn_block_kernel, num_heads=num_heads),
        out_shape=jax.ShapeDtypeStruct((B, S, E), x.dtype),
        grid_spec=pltpu.PrefetchScalarGridSpec(
            num_scalar_prefetch=0,
            grid=(B,),
            in_specs=[
                pl.BlockSpec((1, S, E), lambda b: (b, 0, 0)),   # x (one batch)
                _const_spec((1, E), lambda b: (0, 0)),          # ln1 gamma
                _const_spec((1, E), lambda b: (0, 0)),          # ln1 beta
                _const_spec((E, 3 * E), lambda b: (0, 0)),      # Wqkv (q pre-scaled)
                _const_spec((E, E), lambda b: (0, 0)),          # Wo
                _const_spec((1, E), lambda b: (0, 0)),          # bo
            ],
            out_specs=pl.BlockSpec((1, S, E), lambda b: (b, 0, 0)),
        ),
        compiler_params=pltpu.CompilerParams(
            dimension_semantics=("parallel",),
            vmem_limit_bytes=vmem),
        cost_estimate=pl.CostEstimate(
            flops=int(flops),
            transcendentals=int(B * num_heads * S * S),
            bytes_accessed=int(bytes_accessed)),
    )(x, g1_2d, b1_2d, wqkv_c, wo_c, bo_2d)


# -----------------------------------------------------------------------------
# MLP block kernel: y = x + fc2(GELU(fc1(LN2(x))))           (row-tiled grid)
# -----------------------------------------------------------------------------
def _mlp_block_kernel(x_ref, g2_ref, b2_ref, w1_ref, bb1_ref, w2_ref, bb2_ref, o_ref):
    xf = x_ref[...].astype(jnp.float32)                   # (tile, E)
    mxu_dtype = w1_ref.dtype

    xn = _ln_f32(xf, g2_ref[...].astype(jnp.float32), b2_ref[...].astype(jnp.float32))
    h = jnp.dot(xn.astype(mxu_dtype), w1_ref[...], preferred_element_type=jnp.float32)
    h = h + bb1_ref[...].astype(jnp.float32)

    # exact GELU (erf form; torch.nn.GELU default) -- erf runs on the EUP slot
    h = 0.5 * h * (1.0 + lax.erf(h * jnp.float32(1.0 / math.sqrt(2.0))))

    y = jnp.dot(h.astype(mxu_dtype), w2_ref[...], preferred_element_type=jnp.float32)
    y = y + bb2_ref[...].astype(jnp.float32)
    o_ref[...] = (xf + y).astype(o_ref.dtype)


def _pick_row_tile(m, tm_max):
    """Largest multiple-of-8 divisor of m that is <= tm_max (None if m is ragged)."""
    if m < 8 or m % 8 != 0:
        return None
    best = None
    cand = 8
    top = min(tm_max, m)
    while cand <= top:
        if m % cand == 0:
            best = cand
        cand += 8
    return best


def mlp_block(x, g2, b2, w1, bm1, w2, bm2, *, tm=512, mxu_dtype=jnp.bfloat16):
    B, S, E = x.shape
    H = w1.shape[1]
    M = B * S
    x_it = jnp.dtype(x.dtype).itemsize
    w_it = jnp.dtype(mxu_dtype).itemsize

    x2d = x.reshape(M, E)
    tile = _pick_row_tile(M, tm)
    if tile is None:
        # Ragged row count: fall back to a padded copy (not hit for typical ViT shapes).
        Mp = _round_up(max(M, 8), 8)
        x2d = jnp.pad(x2d, ((0, Mp - M), (0, 0)))
        tile = _pick_row_tile(Mp, tm)
    else:
        Mp = M

    w1_c = w1.astype(mxu_dtype)
    w2_c = w2.astype(mxu_dtype)
    g2_2d = g2.reshape(1, E)
    b2_2d = b2.reshape(1, E)
    bm1_2d = bm1.reshape(1, H)
    bm2_2d = bm2.reshape(1, E)

    flops = 2 * Mp * (E * H + H * E)
    w_bytes = (w1_c.size + w2_c.size) * w_it
    bytes_accessed = w_bytes + 2 * Mp * E * x_it
    vmem = _vmem_limit(
        w_bytes,                                  # single-buffered weights (Buffered(1))
        4 * tile * E * x_it,                      # double-buffered x / out tiles
        4 * (2 * tile * H + 2 * tile * E),        # f32 hidden / LN intermediates
    )
    # TODO(synk): for ViT-L-sized H add a reduction grid axis over H (tile W1 cols /
    # W2 rows, f32 accumulator with pl.when init/writeback) to bound VMEM on v7x.

    out2d = pl.pallas_call(
        _mlp_block_kernel,
        out_shape=jax.ShapeDtypeStruct((Mp, E), x.dtype),
        grid_spec=pltpu.PrefetchScalarGridSpec(
            num_scalar_prefetch=0,
            grid=(Mp // tile,),
            in_specs=[
                pl.BlockSpec((tile, E), lambda i: (i, 0)),    # x row tile
                _const_spec((1, E), lambda i: (0, 0)),        # ln2 gamma
                _const_spec((1, E), lambda i: (0, 0)),        # ln2 beta
                _const_spec((E, H), lambda i: (0, 0)),        # W1
                _const_spec((1, H), lambda i: (0, 0)),        # b1
                _const_spec((H, E), lambda i: (0, 0)),        # W2
                _const_spec((1, E), lambda i: (0, 0)),        # b2
            ],
            out_specs=pl.BlockSpec((tile, E), lambda i: (i, 0)),
        ),
        compiler_params=pltpu.CompilerParams(
            dimension_semantics=("parallel",),     # shards row tiles across v7x TCs
            vmem_limit_bytes=vmem),
        cost_estimate=pl.CostEstimate(
            flops=int(flops),
            transcendentals=int(Mp * H),
            bytes_accessed=int(bytes_accessed)),
    )(x2d, g2_2d, b2_2d, w1_c, bm1_2d, w2_c, bm2_2d)

    if Mp != M:
        out2d = out2d[:M]
    return out2d.reshape(B, S, E)


# -----------------------------------------------------------------------------
# EncoderLayer forward (eval mode)
# -----------------------------------------------------------------------------
def encoder_layer_forward(x, params, *, num_heads, tm=512, mxu_dtype=jnp.bfloat16):
    x = attention_block(x, params["ln1_g"], params["ln1_b"],
                        params["wqkv"], params["wo"], params["bo"],
                        num_heads=num_heads, mxu_dtype=mxu_dtype)
    x = mlp_block(x, params["ln2_g"], params["ln2_b"],
                  params["w1"], params["b1"], params["w2"], params["b2"],
                  tm=tm, mxu_dtype=mxu_dtype)
    return x


def init_params(key, embed_dim, hidden_dim, dtype=jnp.float32):
    """nn.Linear-style uniform(-1/sqrt(fan_in), 1/sqrt(fan_in)) init.
    Weights stored as (in_features, out_features) = transpose of torch layout."""
    E, H = embed_dim, hidden_dim
    ks = jax.random.split(key, 7)
    bE = 1.0 / math.sqrt(E)
    bH = 1.0 / math.sqrt(H)
    wqkv = jax.random.uniform(ks[0], (E, 3 * E), dtype, -bE, bE)   # qkv_bias=False
    wo = jax.random.uniform(ks[1], (E, E), dtype, -bE, bE)
    bo = jax.random.uniform(ks[2], (E,), dtype, -bE, bE)
    w1 = jax.random.uniform(ks[3], (E, H), dtype, -bE, bE)
    b1 = jax.random.uniform(ks[4], (H,), dtype, -bE, bE)
    w2 = jax.random.uniform(ks[5], (H, E), dtype, -bH, bH)
    b2 = jax.random.uniform(ks[6], (E,), dtype, -bH, bH)
    return dict(ln1_g=jnp.ones((E,), dtype), ln1_b=jnp.zeros((E,), dtype),
                ln2_g=jnp.ones((E,), dtype), ln2_b=jnp.zeros((E,), dtype),
                wqkv=wqkv, wo=wo, bo=bo, w1=w1, b1=b1, w2=w2, b2=b2)


def encoder_layer_reference(x, params, *, num_heads):
    """Pure-JAX f32 reference with the module's exact (eval-mode) semantics."""
    def ln(t, g, b, eps=_LN_EPS):
        n = t.shape[-1]
        mean = t.mean(-1, keepdims=True)
        std = jnp.sqrt(((t - mean) ** 2).sum(-1, keepdims=True) / (n - 1))
        return g * (t - mean) / (std + eps) + b

    B, S, E = x.shape
    hd = E // num_heads
    hp = jax.lax.Precision.HIGHEST   # true-f32 matmuls for the reference

    xn = ln(x, params["ln1_g"], params["ln1_b"])
    qkv = jnp.matmul(xn, params["wqkv"], precision=hp)
    qkv = qkv.reshape(B, S, 3, num_heads, hd).transpose(2, 0, 3, 1, 4)
    q, k, v = qkv[0], qkv[1], qkv[2]
    s = jnp.einsum("bhqd,bhkd->bhqk", q, k, precision=hp) / math.sqrt(hd)
    p = jax.nn.softmax(s, axis=-1)
    o = jnp.einsum("bhqk,bhkd->bhqd", p, v, precision=hp)
    o = o.transpose(0, 2, 1, 3).reshape(B, S, E)
    x = x + jnp.matmul(o, params["wo"], precision=hp) + params["bo"]

    xn2 = ln(x, params["ln2_g"], params["ln2_b"])
    h = jnp.matmul(xn2, params["w1"], precision=hp) + params["b1"]
    h = 0.5 * h * (1.0 + lax.erf(h * (1.0 / math.sqrt(2.0))))
    x = x + jnp.matmul(h, params["w2"], precision=hp) + params["b2"]
    return x


if __name__ == "__main__":
    # Small shapes consistent with the module: batch=2, seq=8, embed=32,
    # num_heads=4 (head_dim=8), mlp_ratio=4 -> hidden=128.
    B, S, E, NH = 2, 8, 32, 4
    H = 4 * E

    key = jax.random.PRNGKey(0)
    kx, kp = jax.random.split(key)
    x = jax.random.normal(kx, (B, S, E), jnp.float32)
    params = init_params(kp, E, H)

    out = encoder_layer_forward(x, params, num_heads=NH)   # default bf16 MXU path
    out = jax.block_until_ready(out)

    ref = encoder_layer_reference(x, params, num_heads=NH)
    assert out.shape == (B, S, E)
    assert bool(jnp.all(jnp.isfinite(out)))
    # bf16 MXU operands + approx-reciprocal softmax (per perf feedback) => tolerance
    # loosened vs the f32 reference.  Exact semantics are available via
    # encoder_layer_forward(..., mxu_dtype=jnp.float32).
    max_err = float(jnp.max(jnp.abs(out - ref)))
    scale = float(jnp.max(jnp.abs(ref))) + 1e-6
    assert max_err <= 0.05 * scale, f"mismatch vs reference: {max_err} (ref scale {scale})"

    print("KERNEL_OK")
</pallas_src>

<mosaic_0001>
module attributes {stable_mosaic.version = 11 : i64} {
  func.func @_attn_block_kernel(%arg0: i32, %arg1: memref<1x8x32xf32, #tpu.memory_space<vmem>>, %arg2: memref<1x32xf32, #tpu.memory_space<vmem>>, %arg3: memref<1x32xf32, #tpu.memory_space<vmem>>, %arg4: memref<32x96xbf16, #tpu.memory_space<vmem>>, %arg5: memref<32x32xbf16, #tpu.memory_space<vmem>>, %arg6: memref<1x32xf32, #tpu.memory_space<vmem>>, %arg7: memref<1x8x32xf32, #tpu.memory_space<vmem>>) attributes {dimension_semantics = [#tpu.dimension_semantics<parallel>], iteration_bounds = array<i64: 2>, scalar_prefetch = 0 : i64, scratch_operands = 0 : i64, tpu.core_type = #tpu.core_type<tc>, window_params = [{transform_indices = @transform_0, window_bounds = array<i64: 1, 8, 32>}, {pipeline_mode = #tpu.pipeline_mode<synchronous>, transform_indices = @transform_1, window_bounds = array<i64: 1, 32>}, {pipeline_mode = #tpu.pipeline_mode<synchronous>, transform_indices = @transform_2, window_bounds = array<i64: 1, 32>}, {pipeline_mode = #tpu.pipeline_mode<synchronous>, transform_indices = @transform_3, window_bounds = array<i64: 32, 96>}, {pipeline_mode = #tpu.pipeline_mode<synchronous>, transform_indices = @transform_4, window_bounds = array<i64: 32, 32>}, {pipeline_mode = #tpu.pipeline_mode<synchronous>, transform_indices = @transform_5, window_bounds = array<i64: 1, 32>}, {transform_indices = @transform_6, window_bounds = array<i64: 1, 8, 32>}]} {
    %c0 = arith.constant 0 : index
    %c0_0 = arith.constant 0 : index
    %c0_1 = arith.constant 0 : index
    %0 = vector.load %arg1[%c0, %c0_0, %c0_1] : memref<1x8x32xf32, #tpu.memory_space<vmem>>, vector<1x8x32xf32>
    %1 = vector.shape_cast %0 : vector<1x8x32xf32> to vector<8x32xf32>
    %c0_2 = arith.constant 0 : index
    %c0_3 = arith.constant 0 : index
    %2 = vector.load %arg2[%c0_2, %c0_3] : memref<1x32xf32, #tpu.memory_space<vmem>>, vector<1x32xf32>
    %c0_4 = arith.constant 0 : index
    %c0_5 = arith.constant 0 : index
    %3 = vector.load %arg3[%c0_4, %c0_5] : memref<1x32xf32, #tpu.memory_space<vmem>>, vector<1x32xf32>
    %cst = arith.constant dense<0.000000e+00> : vector<8xf32>
    %4 = vector.multi_reduction <add>, %1, %cst [1] : vector<8x32xf32> to vector<8xf32>
    %5 = vector.shape_cast %4 : vector<8xf32> to vector<8x1xf32>
    %cst_6 = arith.constant 3.200000e+01 : f32
    %6 = vector.broadcast %cst_6 : f32 to vector<8x1xf32>
    %7 = arith.divf %5, %6 : vector<8x1xf32>
    %8 = vector.broadcast %7 : vector<8x1xf32> to vector<8x32xf32>
    %9 = arith.subf %1, %8 : vector<8x32xf32>
    %10 = arith.mulf %9, %9 : vector<8x32xf32>
    %cst_7 = arith.constant dense<0.000000e+00> : vector<8xf32>
    %11 = vector.multi_reduction <add>, %10, %cst_7 [1] : vector<8x32xf32> to vector<8xf32>
    %12 = vector.shape_cast %11 : vector<8xf32> to vector<8x1xf32>
    %cst_8 = arith.constant 3.100000e+01 : f32
    %13 = vector.broadcast %cst_8 : f32 to vector<8x1xf32>
    %14 = arith.divf %12, %13 : vector<8x1xf32>
    %15 = math.sqrt %14 : vector<8x1xf32>
    %16 = vector.broadcast %7 : vector<8x1xf32> to vector<8x32xf32>
    %17 = arith.subf %1, %16 : vector<8x32xf32>
    %18 = vector.broadcast %2 : vector<1x32xf32> to vector<8x32xf32>
    %19 = arith.mulf %18, %17 : vector<8x32xf32>
    %cst_9 = arith.constant 9.99999997E-7 : f32
    %20 = vector.broadcast %cst_9 : f32 to vector<8x1xf32>
    %21 = arith.addf %15, %20 : vector<8x1xf32>
    %22 = vector.broadcast %21 : vector<8x1xf32> to vector<8x32xf32>
    %23 = arith.divf %19, %22 : vector<8x32xf32>
    %24 = vector.broadcast %3 : vector<1x32xf32> to vector<8x32xf32>
    %25 = arith.addf %23, %24 : vector<8x32xf32>
    %26 = arith.truncf %25 : vector<8x32xf32> to vector<8x32xbf16>
    %c0_10 = arith.constant 0 : index
    %c0_11 = arith.constant 0 : index
    %27 = vector.load %arg4[%c0_10, %c0_11] : memref<32x96xbf16, #tpu.memory_space<vmem>>, vector<32x96xbf16>
    %cst_12 = arith.constant dense<0.000000e+00> : vector<8x96xf32>
    %28 = tpu.matmul %26, %27, %cst_12 {dimension_numbers = #tpu.dot_dimension_numbers<[1], [0], [0], [1], [0, 0, 1, 1], [], []>} : vector<8x32xbf16>, vector<32x96xbf16>, vector<8x96xf32> -> vector<8x96xf32>
    %cst_13 = arith.constant 0.000000e+00 : f32
    %29 = vector.broadcast %cst_13 : f32 to vector<8x32xf32>
    %30 = vector.extract_strided_slice %28 {offsets = [0, 0], sizes = [8, 8], strides = [1, 1]} : vector<8x96xf32> to vector<8x8xf32>
    %31 = arith.truncf %30 : vector<8x8xf32> to vector<8x8xbf16>
    %32 = vector.extract_strided_slice %28 {offsets = [0, 32], sizes = [8, 8], strides = [1, 1]} : vector<8x96xf32> to vector<8x8xf32>
    %33 = arith.truncf %32 : vector<8x8xf32> to vector<8x8xbf16>
    %34 = vector.extract_strided_slice %28 {offsets = [0, 64], sizes = [8, 8], strides = [1, 1]} : vector<8x96xf32> to vector<8x8xf32>
    %35 = arith.truncf %34 : vector<8x8xf32> to vector<8x8xbf16>
    %cst_14 = arith.constant dense<0.000000e+00> : vector<8x8xf32>
    %36 = tpu.matmul %31, %33, %cst_14 {dimension_numbers = #tpu.dot_dimension_numbers<[1], [1], [0], [0], [0, 0, 1, 0], [], []>} : vector<8x8xbf16>, vector<8x8xbf16>, vector<8x8xf32> -> vector<8x8xf32>
    %cst_15 = arith.constant dense<0xFF800000> : vector<8xf32>
    %37 = vector.multi_reduction <maximumf>, %36, %cst_15 [1] : vector<8x8xf32> to vector<8xf32>
    %38 = vector.shape_cast %37 : vector<8xf32> to vector<8x1xf32>
    %39 = vector.broadcast %38 : vector<8x1xf32> to vector<8x8xf32>
    %40 = arith.subf %36, %39 : vector<8x8xf32>
    %41 = math.exp %40 : vector<8x8xf32>
    %cst_16 = arith.constant dense<0.000000e+00> : vector<8xf32>
    %42 = vector.multi_reduction <add>, %41, %cst_16 [1] : vector<8x8xf32> to vector<8xf32>
    %43 = vector.shape_cast %42 : vector<8xf32> to vector<8x1xf32>
    %44 = tpu.reciprocal %43 {approx = true} : vector<8x1xf32> -> vector<8x1xf32>
    %45 = vector.broadcast %44 : vector<8x1xf32> to vector<8x8xf32>
    %46 = arith.mulf %41, %45 : vector<8x8xf32>
    %47 = arith.truncf %46 : vector<8x8xf32> to vector<8x8xbf16>
    %cst_17 = arith.constant dense<0.000000e+00> : vector<8x8xf32>
    %48 = tpu.matmul %47, %35, %cst_17 {dimension_numbers = #tpu.dot_dimension_numbers<[1], [0], [0], [1], [0, 0, 1, 1], [], []>} : vector<8x8xbf16>, vector<8x8xbf16>, vector<8x8xf32> -> vector<8x8xf32>
    %49 = arith.truncf %48 : vector<8x8xf32> to vector<8x8xbf16>
    %c0_18 = arith.constant 0 : index
    %c0_19 = arith.constant 0 : index
    %50 = vector.load %arg5[%c0_18, %c0_19] : memref<32x32xbf16, #tpu.memory_space<vmem>>, vector<8x32xbf16>
    %cst_20 = arith.constant dense<0.000000e+00> : vector<8x32xf32>
    %51 = tpu.matmul %49, %50, %cst_20 {dimension_numbers = #tpu.dot_dimension_numbers<[1], [0], [0], [1], [0, 0, 1, 1], [], []>} : vector<8x8xbf16>, vector<8x32xbf16>, vector<8x32xf32> -> vector<8x32xf32>
    %52 = arith.addf %29, %51 : vector<8x32xf32>
    %53 = vector.extract_strided_slice %28 {offsets = [0, 8], sizes = [8, 8], strides = [1, 1]} : vector<8x96xf32> to vector<8x8xf32>
    %54 = arith.truncf %53 : vector<8x8xf32> to vector<8x8xbf16>
    %55 = vector.extract_strided_slice %28 {offsets = [0, 40], sizes = [8, 8], strides = [1, 1]} : vector<8x96xf32> to vector<8x8xf32>
    %56 = arith.truncf %55 : vector<8x8xf32> to vector<8x8xbf16>
    %57 = vector.extract_strided_slice %28 {offsets = [0, 72], sizes = [8, 8], strides = [1, 1]} : vector<8x96xf32> to vector<8x8xf32>
    %58 = arith.truncf %57 : vector<8x8xf32> to vector<8x8xbf16>
    %cst_21 = arith.constant dense<0.000000e+00> : vector<8x8xf32>
    %59 = tpu.matmul %54, %56, %cst_21 {dimension_numbers = #tpu.dot_dimension_numbers<[1], [1], [0], [0], [0, 0, 1, 0], [], []>} : vector<8x8xbf16>, vector<8x8xbf16>, vector<8x8xf32> -> vector<8x8xf32>
    %cst_22 = arith.constant dense<0xFF800000> : vector<8xf32>
    %60 = vector.multi_reduction <maximumf>, %59, %cst_22 [1] : vector<8x8xf32> to vector<8xf32>
    %61 = vector.shape_cast %60 : vector<8xf32> to vector<8x1xf32>
    %62 = vector.broadcast %61 : vector<8x1xf32> to vector<8x8xf32>
    %63 = arith.subf %59, %62 : vector<8x8xf32>
    %64 = math.exp %63 : vector<8x8xf32>
    %cst_23 = arith.constant dense<0.000000e+00> : vector<8xf32>
    %65 = vector.multi_reduction <add>, %64, %cst_23 [1] : vector<8x8xf32> to vector<8xf32>
    %66 = vector.shape_cast %65 : vector<8xf32> to vector<8x1xf32>
    %67 = tpu.reciprocal %66 {approx = true} : vector<8x1xf32> -> vector<8x1xf32>
    %68 = vector.broadcast %67 : vector<8x1xf32> to vector<8x8xf32>
    %69 = arith.mulf %64, %68 : vector<8x8xf32>
    %70 = arith.truncf %69 : vector<8x8xf32> to vector<8x8xbf16>
    %cst_24 = arith.constant dense<0.000000e+00> : vector<8x8xf32>
    %71 = tpu.matmul %70, %58, %cst_24 {dimension_numbers = #tpu.dot_dimension_numbers<[1], [0], [0], [1], [0, 0, 1, 1], [], []>} : vector<8x8xbf16>, vector<8x8xbf16>, vector<8x8xf32> -> vector<8x8xf32>
    %72 = arith.truncf %71 : vector<8x8xf32> to vector<8x8xbf16>
    %c8 = arith.constant 8 : index
    %c0_25 = arith.constant 0 : index
    %73 = vector.load %arg5[%c8, %c0_25] : memref<32x32xbf16, #tpu.memory_space<vmem>>, vector<8x32xbf16>
    %cst_26 = arith.constant dense<0.000000e+00> : vector<8x32xf32>
    %74 = tpu.matmul %72, %73, %cst_26 {dimension_numbers = #tpu.dot_dimension_numbers<[1], [0], [0], [1], [0, 0, 1, 1], [], []>} : vector<8x8xbf16>, vector<8x32xbf16>, vector<8x32xf32> -> vector<8x32xf32>
    %75 = arith.addf %52, %74 : vector<8x32xf32>
    %76 = vector.extract_strided_slice %28 {offsets = [0, 16], sizes = [8, 8], strides = [1, 1]} : vector<8x96xf32> to vector<8x8xf32>
    %77 = arith.truncf %76 : vector<8x8xf32> to vector<8x8xbf16>
    %78 = vector.extract_strided_slice %28 {offsets = [0, 48], sizes = [8, 8], strides = [1, 1]} : vector<8x96xf32> to vector<8x8xf32>
    %79 = arith.truncf %78 : vector<8x8xf32> to vector<8x8xbf16>
    %80 = vector.extract_strided_slice %28 {offsets = [0, 80], sizes = [8, 8], strides = [1, 1]} : vector<8x96xf32> to vector<8x8xf32>
    %81 = arith.truncf %80 : vector<8x8xf32> to vector<8x8xbf16>
    %cst_27 = arith.constant dense<0.000000e+00> : vector<8x8xf32>
    %82 = tpu.matmul %77, %79, %cst_27 {dimension_numbers = #tpu.dot_dimension_numbers<[1], [1], [0], [0], [0, 0, 1, 0], [], []>} : vector<8x8xbf16>, vector<8x8xbf16>, vector<8x8xf32> -> vector<8x8xf32>
    %cst_28 = arith.constant dense<0xFF800000> : vector<8xf32>
    %83 = vector.multi_reduction <maximumf>, %82, %cst_28 [1] : vector<8x8xf32> to vector<8xf32>
    %84 = vector.shape_cast %83 : vector<8xf32> to vector<8x1xf32>
    %85 = vector.broadcast %84 : vector<8x1xf32> to vector<8x8xf32>
    %86 = arith.subf %82, %85 : vector<8x8xf32>
    %87 = math.exp %86 : vector<8x8xf32>
    %cst_29 = arith.constant dense<0.000000e+00> : vector<8xf32>
    %88 = vector.multi_reduction <add>, %87, %cst_29 [1] : vector<8x8xf32> to vector<8xf32>
    %89 = vector.shape_cast %88 : vector<8xf32> to vector<8x1xf32>
    %90 = tpu.reciprocal %89 {approx = true} : vector<8x1xf32> -> vector<8x1xf32>
    %91 = vector.broadcast %90 : vector<8x1xf32> to vector<8x8xf32>
    %92 = arith.mulf %87, %91 : vector<8x8xf32>
    %93 = arith.truncf %92 : vector<8x8xf32> to vector<8x8xbf16>
    %cst_30 = arith.constant dense<0.000000e+00> : vector<8x8xf32>
    %94 = tpu.matmul %93, %81, %cst_30 {dimension_numbers = #tpu.dot_dimension_numbers<[1], [0], [0], [1], [0, 0, 1, 1], [], []>} : vector<8x8xbf16>, vector<8x8xbf16>, vector<8x8xf32> -> vector<8x8xf32>
    %95 = arith.truncf %94 : vector<8x8xf32> to vector<8x8xbf16>
    %c16 = arith.constant 16 : index
    %c0_31 = arith.constant 0 : index
    %96 = vector.load %arg5[%c16, %c0_31] : memref<32x32xbf16, #tpu.memory_space<vmem>>, vector<8x32xbf16>
    %cst_32 = arith.constant dense<0.000000e+00> : vector<8x32xf32>
    %97 = tpu.matmul %95, %96, %cst_32 {dimension_numbers = #tpu.dot_dimension_numbers<[1], [0], [0], [1], [0, 0, 1, 1], [], []>} : vector<8x8xbf16>, vector<8x32xbf16>, vector<8x32xf32> -> vector<8x32xf32>
    %98 = arith.addf %75, %97 : vector<8x32xf32>
    %99 = vector.extract_strided_slice %28 {offsets = [0, 24], sizes = [8, 8], strides = [1, 1]} : vector<8x96xf32> to vector<8x8xf32>
    %100 = arith.truncf %99 : vector<8x8xf32> to vector<8x8xbf16>
    %101 = vector.extract_strided_slice %28 {offsets = [0, 56], sizes = [8, 8], strides = [1, 1]} : vector<8x96xf32> to vector<8x8xf32>
    %102 = arith.truncf %101 : vector<8x8xf32> to vector<8x8xbf16>
    %103 = vector.extract_strided_slice %28 {offsets = [0, 88], sizes = [8, 8], strides = [1, 1]} : vector<8x96xf32> to vector<8x8xf32>
    %104 = arith.truncf %103 : vector<8x8xf32> to vector<8x8xbf16>
    %cst_33 = arith.constant dense<0.000000e+00> : vector<8x8xf32>
    %105 = tpu.matmul %100, %102, %cst_33 {dimension_numbers = #tpu.dot_dimension_numbers<[1], [1], [0], [0], [0, 0, 1, 0], [], []>} : vector<8x8xbf16>, vector<8x8xbf16>, vector<8x8xf32> -> vector<8x8xf32>
    %cst_34 = arith.constant dense<0xFF800000> : vector<8xf32>
    %106 = vector.multi_reduction <maximumf>, %105, %cst_34 [1] : vector<8x8xf32> to vector<8xf32>
    %107 = vector.shape_cast %106 : vector<8xf32> to vector<8x1xf32>
    %108 = vector.broadcast %107 : vector<8x1xf32> to vector<8x8xf32>
    %109 = arith.subf %105, %108 : vector<8x8xf32>
    %110 = math.exp %109 : vector<8x8xf32>
    %cst_35 = arith.constant dense<0.000000e+00> : vector<8xf32>
    %111 = vector.multi_reduction <add>, %110, %cst_35 [1] : vector<8x8xf32> to vector<8xf32>
    %112 = vector.shape_cast %111 : vector<8xf32> to vector<8x1xf32>
    %113 = tpu.reciprocal %112 {approx = true} : vector<8x1xf32> -> vector<8x1xf32>
    %114 = vector.broadcast %113 : vector<8x1xf32> to vector<8x8xf32>
    %115 = arith.mulf %110, %114 : vector<8x8xf32>
    %116 = arith.truncf %115 : vector<8x8xf32> to vector<8x8xbf16>
    %cst_36 = arith.constant dense<0.000000e+00> : vector<8x8xf32>
    %117 = tpu.matmul %116, %104, %cst_36 {dimension_numbers = #tpu.dot_dimension_numbers<[1], [0], [0], [1], [0, 0, 1, 1], [], []>} : vector<8x8xbf16>, vector<8x8xbf16>, vector<8x8xf32> -> vector<8x8xf32>
    %118 = arith.truncf %117 : vector<8x8xf32> to vector<8x8xbf16>
    %c24 = arith.constant 24 : index
    %c0_37 = arith.constant 0 : index
    %119 = vector.load %arg5[%c24, %c0_37] : memref<32x32xbf16, #tpu.memory_space<vmem>>, vector<8x32xbf16>
    %cst_38 = arith.constant dense<0.000000e+00> : vector<8x32xf32>
    %120 = tpu.matmul %118, %119, %cst_38 {dimension_numbers = #tpu.dot_dimension_numbers<[1], [0], [0], [1], [0, 0, 1, 1], [], []>} : vector<8x8xbf16>, vector<8x32xbf16>, vector<8x32xf32> -> vector<8x32xf32>
    %121 = arith.addf %98, %120 : vector<8x32xf32>
    %c0_39 = arith.constant 0 : index
    %c0_40 = arith.constant 0 : index
    %122 = vector.load %arg6[%c0_39, %c0_40] : memref<1x32xf32, #tpu.memory_space<vmem>>, vector<1x32xf32>
    %123 = vector.broadcast %122 : vector<1x32xf32> to vector<8x32xf32>
    %124 = arith.addf %121, %123 : vector<8x32xf32>
    %125 = arith.addf %1, %124 : vector<8x32xf32>
    %c0_41 = arith.constant 0 : index
    %c0_42 = arith.constant 0 : index
    %c0_43 = arith.constant 0 : index
    %126 = vector.load %arg7[%c0_41, %c0_42, %c0_43] : memref<1x8x32xf32, #tpu.memory_space<vmem>>, vector<1x8x32xf32>
    %127 = vector.shape_cast %126 : vector<1x8x32xf32> to vector<8x32xf32>
    %128 = vector.shape_cast %125 : vector<8x32xf32> to vector<1x8x32xf32>
    tpu.vector_store %arg7[%c0_41, %c0_42, %c0_43], %128 {strides = array<i32>} : memref<1x8x32xf32, #tpu.memory_space<vmem>>, vector<1x8x32xf32>,
    return
  }
  func.func @transform_0(%arg0: i32) -> (i32, i32, i32) {
    %c0_i32 = arith.constant 0 : i32
    %c0_i32_0 = arith.constant 0 : i32
    %c0_i32_1 = arith.constant 0 : i32
    return %arg0, %c0_i32, %c0_i32_0 : i32, i32, i32
  }
  func.func @transform_1(%arg0: i32) -> (i32, i32) {
    %c0_i32 = arith.constant 0 : i32
    %c0_i32_0 = arith.constant 0 : i32
    %c0_i32_1 = arith.constant 0 : i32
    return %c0_i32, %c0_i32_0 : i32, i32
  }
  func.func @transform_2(%arg0: i32) -> (i32, i32) {
    %c0_i32 = arith.constant 0 : i32
    %c0_i32_0 = arith.constant 0 : i32
    %c0_i32_1 = arith.constant 0 : i32
    return %c0_i32, %c0_i32_0 : i32, i32
  }
  func.func @transform_3(%arg0: i32) -> (i32, i32) {
    %c0_i32 = arith.constant 0 : i32
    %c0_i32_0 = arith.constant 0 : i32
    %c0_i32_1 = arith.constant 0 : i32
    return %c0_i32, %c0_i32_0 : i32, i32
  }
  func.func @transform_4(%arg0: i32) -> (i32, i32) {
    %c0_i32 = arith.constant 0 : i32
    %c0_i32_0 = arith.constant 0 : i32
    %c0_i32_1 = arith.constant 0 : i32
    return %c0_i32, %c0_i32_0 : i32, i32
  }
  func.func @transform_5(%arg0: i32) -> (i32, i32) {
    %c0_i32 = arith.constant 0 : i32
    %c0_i32_0 = arith.constant 0 : i32
    %c0_i32_1 = arith.constant 0 : i32
    return %c0_i32, %c0_i32_0 : i32, i32
  }
  func.func @transform_6(%arg0: i32) -> (i32, i32, i32) {
    %c0_i32 = arith.constant 0 : i32
    %c0_i32_0 = arith.constant 0 : i32
    %c0_i32_1 = arith.constant 0 : i32
    return %arg0, %c0_i32, %c0_i32_0 : i32, i32, i32
  }
}

</mosaic_0001>

<llo_original>
// kernel: tpu_custom_call.1
$region0: #{tpu_custom_call.1}
  #allocation0 [shape = 'u32[]', space=smem, size = 0x4, offset = 0x4, fixed_abs, tag = 'smem constant byte address 0x4 - core index']
  #allocation1 [shape = 'u32[144,128]{1,0:T(1,128)}', space=vmem, size = 0x12000, scoped, tag = 'internal scratch']
  %s0 = inlined_call_operand.hbm [shape: f32[2,8,32], index: 0, kind: input, shape index: {}]
  %s1 = inlined_call_operand.vmem [shape: f32[1,32], index: 1, kind: input, shape index: {}]
  %s2 = inlined_call_operand.vmem [shape: f32[1,32], index: 2, kind: input, shape index: {}]
  %s3 = inlined_call_operand.hbm [shape: bf16[32,96], index: 3, kind: input, shape index: {}]
  %s4 = inlined_call_operand.hbm [shape: bf16[32,32], index: 4, kind: input, shape index: {}]
  %s5 = inlined_call_operand.vmem [shape: f32[1,32], index: 5, kind: input, shape index: {}]
  %s6 = inlined_call_operand.hbm [shape: f32[2,8,32], index: 6, kind: output, shape index: {}]
  %s7 = sld [smem:[#allocation0]]
  $region69: #{tpu_custom_call.1} parent=0
    _
  %s9 = ssub.s32 1, %s7
  %s10 = scalar_select 0, %s9, %s7
  $region1: #{tpu_custom_call.1} parent=0
    #allocation2 [shape = 'u8[8192]{0}', space=vmem, size = 0x2000, scoped, tag = 'input window, operand 0']
    #allocation3 [shape = 's32[2]{0}', space=sflag, size = 0x8, scoped, tag = 'scoped memory for tpu_custom_call.1']
    #allocation4 [shape = 's32[2]{0}', space=sflag, size = 0x8, scoped, tag = 'scoped memory for tpu_custom_call.1']
    #allocation5 [shape = 'u8[8192]{0}', space=vmem, size = 0x2000, scoped, tag = 'input window, operand 3, single buffered']
    #allocation6 [shape = 's32[1]{0}', space=sflag, size = 0x4, scoped, tag = 'scoped memory for tpu_custom_call.1']
    #allocation7 [shape = 'u8[8192]{0}', space=vmem, size = 0x2000, scoped, tag = 'input window, operand 4, single buffered']
    #allocation8 [shape = 'u8[8192]{0}', space=vmem, size = 0x2000, scoped, tag = 'output window, operand 0']
    %11 = vsyncpa [#allocation3], 0
    %s12 = scalar_lea.sflag [#allocation3], 1
    %13 = vsyncpa %s12, 0
    %14 = vsyncpa [#allocation6], 0
    %15 = vsyncpa [#allocation4], 0
    %s16 = scalar_lea.sflag [#allocation4], 1
    %17 = vsyncpa %s16, 0
    loop: start=0, step=1, limit=4
    $region2: #{tpu_custom_call.1} parent=1 // loop_pre_header
      _
    $region3: #{tpu_custom_call.1} parent=1 // loop_header
      %s19 = sphi 0, %s23
      %p20 = scmp.ge.s32.totalorder %s19, 4
      %s29 = sphi 0, %s31
      %s32 = sphi 0, %s29
      %s33 = sphi 0, %s32
      %s49 = sphi 0, %s33
      %s53 = sphi 0, %s53
      %s55 = sphi 0, %s53
      %s56 = sphi 0, %s55
      %s70 = sphi 0, %s56
      %s74 = sphi 0, %s74
      %s76 = sphi 0, %s74
      %s77 = sphi 0, %s76
      %s91 = sphi 0, %s77
      %s95 = sphi 0, %s95
      %s97 = sphi 0, %s95
      %s98 = sphi 0, %s97
      %s112 = sphi 0, %s98
      %s116 = sphi 0, %s116
      %s118 = sphi 0, %s116
      %s119 = sphi 0, %s118
      %s133 = sphi 0, %s119
      %s137 = sphi 0, %s137
      %s139 = sphi 0, %s137
      %s140 = sphi 0, %s139
      %s154 = sphi 0, %s140
      %s160 = sphi 0, %s162
      %s163 = sphi 0, %s160
      %s164 = sphi 0, %s163
      %s180 = sphi 0, %s164
    $region4: #{tpu_custom_call.1} parent=1 // loop_header_branch
      %22 = sbr.rel (%p20) target = $region8
    $region5: #{tpu_custom_call.1} parent=1 // loop_body
      %s24 = ssub.s32 %s19, 1
      %s25 = ssub.s32 %s19, 2
      %s26 = sadd.s32 %s19, 1
      %s27 = ssub.s32 %s19, %s26
      %p28 = scmp.eq.s32.totalorder %s27, 0
      %s30 = sadd.s32 %s29, 1
      %s31 = scalar_select %p28, %s29, %s30
      %p34 = pneg %p28
      %p35 = scmp.eq.s32.totalorder %s19, 1
      %p36 = por %p34, %p35
      %p37 = scmp.ne.s32.totalorder %s29, %s32
      %p38 = scmp.eq.s32.totalorder %s19, 0
      %p39 = por %p37, %p38
      %p40 = scmp.ne.s32.totalorder %s29, %s32
      %p41 = scmp.eq.s32.totalorder %s24, 1
      %p42 = por %p40, %p41
      %p43 = scmp.ne.s32.totalorder %s32, %s33
      %p44 = scmp.eq.s32.totalorder %s24, 0
      %p45 = por %p43, %p44
      %p46 = scmp.ne.s32.totalorder %s32, %s33
      %p47 = scmp.eq.s32.totalorder %s25, 1
      %p48 = por %p46, %p47
      %p50 = scmp.ne.s32.totalorder %s33, %s49
      %p51 = scmp.eq.s32.totalorder %s25, 0
      %p52 = por %p50, %p51
      %s54 = sadd.s32 %s53, 1
      %p57 = scmp.eq.s32.totalorder %s19, 1
      %p58 = scmp.ne.s32.totalorder %s53, %s55
      %p59 = scmp.eq.s32.totalorder %s19, 0
      %p60 = por %p58, %p59
      %p61 = scmp.ne.s32.totalorder %s53, %s55
      %p62 = scmp.eq.s32.totalorder %s24, 1
      %p63 = por %p61, %p62
      %p64 = scmp.ne.s32.totalorder %s55, %s56
      %p65 = scmp.eq.s32.totalorder %s24, 0
      %p66 = por %p64, %p65
      %p67 = scmp.ne.s32.totalorder %s55, %s56
      %p68 = scmp.eq.s32.totalorder %s25, 1
      %p69 = por %p67, %p68
      %p71 = scmp.ne.s32.totalorder %s56, %s70
      %p72 = scmp.eq.s32.totalorder %s25, 0
      %p73 = por %p71, %p72
      %s75 = sadd.s32 %s74, 1
      %p78 = scmp.eq.s32.totalorder %s19, 1
      %p79 = scmp.ne.s32.totalorder %s74, %s76
      %p80 = scmp.eq.s32.totalorder %s19, 0
      %p81 = por %p79, %p80
      %p82 = scmp.ne.s32.totalorder %s74, %s76
      %p83 = scmp.eq.s32.totalorder %s24, 1
      %p84 = por %p82, %p83
      %p85 = scmp.ne.s32.totalorder %s76, %s77
      %p86 = scmp.eq.s32.totalorder %s24, 0
      %p87 = por %p85, %p86
      %p88 = scmp.ne.s32.totalorder %s76, %s77
      %p89 = scmp.eq.s32.totalorder %s25, 1
      %p90 = por %p88, %p89
      %p92 = scmp.ne.s32.totalorder %s77, %s91
      %p93 = scmp.eq.s32.totalorder %s25, 0
      %p94 = por %p92, %p93
      %s96 = sadd.s32 %s95, 1
      %p99 = scmp.eq.s32.totalorder %s19, 1
      %p100 = scmp.ne.s32.totalorder %s95, %s97
      %p101 = scmp.eq.s32.totalorder %s19, 0
      %p102 = por %p100, %p101
      %p103 = scmp.ne.s32.totalorder %s95, %s97
      %p104 = scmp.eq.s32.totalorder %s24, 1
      %p105 = por %p103, %p104
      %p106 = scmp.ne.s32.totalorder %s97, %s98
      %p107 = scmp.eq.s32.totalorder %s24, 0
      %p108 = por %p106, %p107
      %p109 = scmp.ne.s32.totalorder %s97, %s98
      %p110 = scmp.eq.s32.totalorder %s25, 1
      %p111 = por %p109, %p110
      %p113 = scmp.ne.s32.totalorder %s98, %s112
      %p114 = scmp.eq.s32.totalorder %s25, 0
      %p115 = por %p113, %p114
      %s117 = sadd.s32 %s116, 1
      %p120 = scmp.eq.s32.totalorder %s19, 1
      %p121 = scmp.ne.s32.totalorder %s116, %s118
      %p122 = scmp.eq.s32.totalorder %s19, 0
      %p123 = por %p121, %p122
      %p124 = scmp.ne.s32.totalorder %s116, %s118
      %p125 = scmp.eq.s32.totalorder %s24, 1
      %p126 = por %p124, %p125
      %p127 = scmp.ne.s32.totalorder %s118, %s119
      %p128 = scmp.eq.s32.totalorder %s24, 0
      %p129 = por %p127, %p128
      %p130 = scmp.ne.s32.totalorder %s118, %s119
      %p131 = scmp.eq.s32.totalorder %s25, 1
      %p132 = por %p130, %p131
      %p134 = scmp.ne.s32.totalorder %s119, %s133
      %p135 = scmp.eq.s32.totalorder %s25, 0
      %p136 = por %p134, %p135
      %s138 = sadd.s32 %s137, 1
      %p141 = scmp.eq.s32.totalorder %s19, 1
      %p142 = scmp.ne.s32.totalorder %s137, %s139
      %p143 = scmp.eq.s32.totalorder %s19, 0
      %p144 = por %p142, %p143
      %p145 = scmp.ne.s32.totalorder %s137, %s139
      %p146 = scmp.eq.s32.totalorder %s24, 1
      %p147 = por %p145, %p146
      %p148 = scmp.ne.s32.totalorder %s139, %s140
      %p149 = scmp.eq.s32.totalorder %s24, 0
      %p150 = por %p148, %p149
      %p151 = scmp.ne.s32.totalorder %s139, %s140
      %p152 = scmp.eq.s32.totalorder %s25, 1
      %p153 = por %p151, %p152
      %p155 = scmp.ne.s32.totalorder %s140, %s154
      %p156 = scmp.eq.s32.totalorder %s25, 0
      %p157 = por %p155, %p156
      %s158 = ssub.s32 %s19, %s26
      %p159 = scmp.eq.s32.totalorder %s158, 0
      %s161 = sadd.s32 %s160, 1
      %s162 = scalar_select %p159, %s160, %s161
      %p165 = pneg %p159
      %p166 = scmp.eq.s32.totalorder %s19, 1
      %p167 = por %p165, %p166
      %p168 = scmp.ne.s32.totalorder %s160, %s163
      %p169 = scmp.eq.s32.totalorder %s19, 0
      %p170 = por %p168, %p169
      %p171 = scmp.ne.s32.totalorder %s160, %s163
      %p172 = scmp.eq.s32.totalorder %s24, 1
      %p173 = por %p171, %p172
      %p174 = scmp.ne.s32.totalorder %s163, %s164
      %p175 = scmp.eq.s32.totalorder %s24, 0
      %p176 = por %p174, %p175
      %p177 = scmp.ne.s32.totalorder %s163, %s164
      %p178 = scmp.eq.s32.totalorder %s25, 1
      %p179 = por %p177, %p178
      %p181 = scmp.ne.s32.totalorder %s164, %s180
      %p182 = scmp.eq.s32.totalorder %s25, 0
      %p183 = por %p181, %p182
      %p184 = scmp.le.s32.totalorder 1, %s19
      %p185 = scmp.lt.s32.totalorder %s19, 3
      %p186 = pnand %p184, %p185
      %p187 = pneg %p186
      // Predicated region
      $region9: #{tpu_custom_call.1} parent=5 // pred_check
        _
      $region10: #{tpu_custom_call.1} parent=5 // pred_check_branch
        %189 = sbr.rel (%p186) target = $region12
      $region11: #{tpu_custom_call.1} parent=5 // pred_region
        %s190 = ssub.s32 %s19, 1
        // Predicated region
        $region13: #{tpu_custom_call.1} parent=11 // pred_check
          %p191 = pneg %p66
        $region14: #{tpu_custom_call.1} parent=11 // pred_check_branch
          %193 = sbr.rel (%p191) target = $region16
        $region15: #{tpu_custom_call.1} parent=11 // pred_region
          _
        $region16: #{tpu_custom_call.1} parent=11 // pred_fallthru
          _
        // Predicated region
        $region17: #{tpu_custom_call.1} parent=11 // pred_check
          %p194 = pneg %p87
        $region18: #{tpu_custom_call.1} parent=11 // pred_check_branch
          %196 = sbr.rel (%p194) target = $region20
        $region19: #{tpu_custom_call.1} parent=11 // pred_region
          _
        $region20: #{tpu_custom_call.1} parent=11 // pred_fallthru
          _
        // Predicated region
        $region21: #{tpu_custom_call.1} parent=11 // pred_check
          %p197 = pneg %p108
        $region22: #{tpu_custom_call.1} parent=11 // pred_check_branch
          %199 = sbr.rel (%p197) target = $region24
        $region23: #{tpu_custom_call.1} parent=11 // pred_region
          %s201 = ssub.s32 256, 256
          %202 = vsyncadd [#allocation6], %s201
          %s203 = sshll.u32 [#allocation5], 4
          %s204 = int_to_ptr.vmem [resolvable:$true] %s203
          %209 = dma.hbm_to_vmem [thread:$0]  %s3, 256, %s204, [#allocation6], 64, 64, 4
        $region24: #{tpu_custom_call.1} parent=11 // pred_fallthru
          _
        // Predicated region
        $region25: #{tpu_custom_call.1} parent=11 // pred_check
          %p210 = pneg %p129
        $region26: #{tpu_custom_call.1} parent=11 // pred_check_branch
          %212 = sbr.rel (%p210) target = $region28
        $region27: #{tpu_custom_call.1} parent=11 // pred_region
          %s214 = ssub.s32 256, 256
          %215 = vsyncadd [#allocation6], %s214
          %s216 = sshll.u32 [#allocation7], 4
          %s217 = int_to_ptr.vmem [resolvable:$true] %s216
          %222 = dma.hbm_to_vmem [thread:$0]  %s4, 256, %s217, [#allocation6], 64, 64, 4
        $region28: #{tpu_custom_call.1} parent=11 // pred_fallthru
          _
        // Predicated region
        $region29: #{tpu_custom_call.1} parent=11 // pred_check
          %p223 = pneg %p150
        $region30: #{tpu_custom_call.1} parent=11 // pred_check_branch
          %225 = sbr.rel (%p223) target = $region32
        $region31: #{tpu_custom_call.1} parent=11 // pred_region
          _
        $region32: #{tpu_custom_call.1} parent=11 // pred_fallthru
          _
      $region12: #{tpu_custom_call.1} parent=5 // pred_fallthru
        _
      %p226 = scmp.lt.s32.totalorder %s19, 2
      // Predicated region
      $region33: #{tpu_custom_call.1} parent=5 // pred_check
        %p227 = pneg %p226
      $region34: #{tpu_custom_call.1} parent=5 // pred_check_branch
        %229 = sbr.rel (%p227) target = $region36
      $region35: #{tpu_custom_call.1} parent=5 // pred_region
        // Predicated region
        $region37: #{tpu_custom_call.1} parent=35 // pred_check
          %p230 = pneg %p39
        $region38: #{tpu_custom_call.1} parent=35 // pred_check_branch
          %232 = sbr.rel (%p230) target = $region40
        $region39: #{tpu_custom_call.1} parent=35 // pred_region
          %s233 = sand.u32 %s29, 1
          %s234 = scalar_lea.sflag [#allocation3], %s233
          %s235 = sand.u32 %s29, 1
          %s236 = smul.addr %s235, 8
          %s237 = scalar_lea.vmem [#allocation2], %s236
          %s239 = ssub.s32 128, 128
          %240 = vsyncadd %s234, %s239
          %s241 = smul.addr %s19, 128
          %s242 = scalar_lea.hbm %s0, %s241
          %s244 = sshll.u32 %s237, 4
          %s245 = int_to_ptr.vmem [resolvable:$true] %s244
          %247 = dma.hbm_to_vmem [thread:$0]  %s242, 128, %s245, %s234
        $region40: #{tpu_custom_call.1} parent=35 // pred_fallthru
          _
      $region36: #{tpu_custom_call.1} parent=5 // pred_fallthru
        _
      %p248 = scmp.le.s32.totalorder 1, %s19
      %p249 = scmp.lt.s32.totalorder %s19, 3
      %p250 = pnand %p248, %p249
      %p251 = pneg %p250
      // Predicated region
      $region41: #{tpu_custom_call.1} parent=5 // pred_check
        _
      $region42: #{tpu_custom_call.1} parent=5 // pred_check_branch
        %253 = sbr.rel (%p250) target = $region44
      $region43: #{tpu_custom_call.1} parent=5 // pred_region
        %s254 = ssub.s32 %s19, 1
        %s255 = sand.u32 %s32, 1
        %s256 = scalar_lea.sflag [#allocation3], %s255
        %s257 = sand.u32 %s32, 1
        %s258 = smul.addr %s257, 8
        %s259 = scalar_lea.vmem [#allocation2], %s258
        // Predicated region
        $region45: #{tpu_custom_call.1} parent=43 // pred_check
          %p260 = pneg %p45
        $region46: #{tpu_custom_call.1} parent=43 // pred_check_branch
          %262 = sbr.rel (%p260) target = $region48
        $region47: #{tpu_custom_call.1} parent=43 // pred_region
          %263 = dma.done %s256, 128
        $region48: #{tpu_custom_call.1} parent=43 // pred_fallthru
          _
        // Predicated region
        $region49: #{tpu_custom_call.1} parent=43 // pred_check
          %p264 = pneg %p108
        $region50: #{tpu_custom_call.1} parent=43 // pred_check_branch
          %266 = sbr.rel (%p264) target = $region52
        $region51: #{tpu_custom_call.1} parent=43 // pred_region
          %267 = dma.done [#allocation6], 256
        $region52: #{tpu_custom_call.1} parent=43 // pred_fallthru
          _
        // Predicated region
        $region53: #{tpu_custom_call.1} parent=43 // pred_check
          %p268 = pneg %p129
        $region54: #{tpu_custom_call.1} parent=43 // pred_check_branch
          %270 = sbr.rel (%p268) target = $region56
        $region55: #{tpu_custom_call.1} parent=43 // pred_region
          %271 = dma.done [#allocation6], 256
        $region56: #{tpu_custom_call.1} parent=43 // pred_fallthru
          _
        %s272 = sand.u32 %s32, 1
        %s273 = scalar_lea.sflag [#allocation3], %s272
        %s274 = sand.u32 %s32, 1
        %s275 = smul.addr %s274, 8
        %s276 = scalar_lea.vmem [#allocation2], %s275
        %p277 = pneg %p45
        %p278 = pneg %p42
        %p279 = pneg %p66
        %p280 = pneg %p63
        %p281 = pneg %p87
        %p282 = pneg %p84
        %p283 = pneg %p108
        %p284 = pneg %p105
        %p285 = pneg %p129
        %p286 = pneg %p126
        %p287 = pneg %p150
        %p288 = pneg %p147
        %p289 = pneg %p176
        %p290 = pneg %p173
        %s291 = sand.u32 %s163, 1
        %s292 = scalar_lea.sflag [#allocation4], %s291
        %s293 = sand.u32 %s163, 1
        %s294 = smul.addr %s293, 8
        %s295 = scalar_lea.vmem [#allocation8], %s294
        %v297 = vld [vmem:[%s259] sm:$0xff]
        %v298 = vld [vmem:[%s1] sm:$0x1]
        %v299 = vld [vmem:[%s2] sm:$0x1]
        %vm300 = vcmask 261120
        %v301 = vsel %vm300, %v297, 0.0
        %302 = vadd.xlane.f32.xlu0 %v301
        %v303 = vpop.xlane.xlu0 %302
        %v304 = vrcp.pop 32.0
        %v305 = vmul.f32 %v303, %v304
        %v306 = vsub.f32 %v297, %v305
        %v307 = vmul.f32 %v306, %v306
        %v308 = vsel %vm300, %v307, 0.0
        %309 = vadd.xlane.f32.xlu0 %v308
        %v310 = vpop.xlane.xlu0 %309
        %v311 = vrcp.pop 31.0
        %v312 = vmul.f32 %v310, %v311
        %v313 = vrsqrt.pop %v312
        %v314 = vmul.f32 %v312, %v313
        %vm315 = vcmp.eq.f32.partialorder %v312, inf
        %v316 = vsel %vm315, %v312, %v314
        %vm317 = vcmp.eq.f32.partialorder %v312, 0.0
        %v318 = vand.u32 %v312, 2147483648
        %v319 = vsel %vm317, %v318, %v316
        %v321 = vlaneseq
        %v322 = vshrl.u32 %v321, 7
        %v323 = vsub.s32 0, %v322
        %v324 = vrot.slane %v298, %v323
        %v326 = vmul.f32 %v324, %v306
        %v327 = vadd.f32 %v319, 1e-06
        %v328 = vrcp.pop %v327
        %v329 = vmul.f32 %v326, %v328
        %v331 = vlaneseq
        %v332 = vshrl.u32 %v331, 7
        %v333 = vsub.s32 0, %v332
        %v334 = vrot.slane %v299, %v333
        %v336 = vadd.f32 %v329, %v334
        %v337 = vpack.c.bf16 %v336, %v336
        %v338 = vld [vmem:[#allocation5] sm:$0xf]
        %v339 = vld [vmem:[#allocation5 + $0x4] sm:$0xf]
        %v340 = vld [vmem:[#allocation5 + $0x8] sm:$0xf]
        %v341 = vld [vmem:[#allocation5 + $0xc] sm:$0xf]
        %v346 = vunpack.c.l.b16 %v338
        %v347 = vunpack.c.l.b16 %v339
        %v348 = vunpack.c.l.b16 %v340
        %v349 = vunpack.c.l.b16 %v341
        %v350 = vpack.c.b16 %v347, %v346
        %v351 = vpack.c.b16 %v349, %v348
        %v355 = vsel %vm300, %v337, 0
        %357 = vmatprep.subr.bf16.mxu0 0
        %358 = vmatpush1.bf16.msra.mxu0 %v350
        %359 = vmatprep.subr.bf16.mxu0 0
        %360 = vmatpush1.bf16.msra.mxu0 %v351
        %361 = vmatprep.subr.bf16.mxu0 0
        %362 = vmatpush1.bf16.msra.mxu0 0
        %363 = vmatprep.subr.bf16.mxu0 0
        %364 = vmatpush1.bf16.msra.mxu0 0
        %365 = vmatprep.subr.bf16.mxu0 0
        %366 = vmatpush1.bf16.msra.mxu0 0
        %367 = vmatprep.subr.bf16.mxu0 0
        %368 = vmatpush1.bf16.msra.mxu0 0
        %369 = vmatprep.subr.bf16.mxu0 0
        %370 = vmatpush1.bf16.msra.mxu0 0
        %371 = vmatprep.subr.bf16.mxu0 0
        %372 = vmatpush1.bf16.msra.mxu0 0
        %373 = vmatprep.subr.bf16.mxu0 0
        %374 = vmatpush1.bf16.msra.mxu0 0
        %375 = vmatprep.subr.bf16.mxu0 0
        %376 = vmatpush1.bf16.msra.mxu0 0
        %377 = vmatprep.subr.bf16.mxu0 0
        %378 = vmatpush1.bf16.msra.mxu0 0
        %379 = vmatprep.subr.bf16.mxu0 0
        %380 = vmatpush1.bf16.msra.mxu0 0
        %381 = vmatprep.subr.bf16.mxu0 0
        %382 = vmatpush1.bf16.msra.mxu0 0
        %383 = vmatprep.subr.bf16.mxu0 0
        %384 = vmatpush1.bf16.msra.mxu0 0
        %385 = vmatprep.subr.bf16.mxu0 0
        %386 = vmatpush1.bf16.msra.mxu0 0
        %387 = vmatprep.subr.bf16.mxu0 0
        %388 = vmatpush1.bf16.msra.mxu0 0
        %389 = vmatprep.mubr.bf16.mxu0 0
        %390 = vmatmul.mubr.bf16.gmra.mrb[0].mxu0 %v355
        %v391 = vpop.f32.mrb[0].mxu0
        %v392 = vadd.f32 0.0, %v391
        %v393 = vpop.f32.mrb[0].mxu0
        %v394 = vpop.f32.mrb[0].mxu0
        %v395 = vpop.f32.mrb[0].mxu0
        %396 = vdwg.mxu0
        %v397 = vpack.c.bf16 %v392, %v392
        %399 = vrot.lane.b32.xlu0 %v397, 96
        %v400 = vpop.permute.xlu0 %399
        %vm401 = vcmask 64512
        %v403 = vsel %vm401, %v397, 0
        %v406 = vsel %vm401, %v400, 0
        %408 = vmatprep.subr.bf16.mxu0 0
        %409 = vmatpush1.bf16.xpose.msra.mxu0 %v406
        %410 = vmatprep.subr.bf16.mxu0 0
        %411 = vmatpush1.bf16.xpose.msra.mxu0 0
        %412 = vmatprep.subr.bf16.mxu0 0
        %413 = vmatpush1.bf16.xpose.msra.mxu0 0
        %414 = vmatprep.subr.bf16.mxu0 0
        %415 = vmatpush1.bf16.xpose.msra.mxu0 0
        %416 = vmatprep.subr.bf16.mxu0 0
        %417 = vmatpush1.bf16.xpose.msra.mxu0 0
        %418 = vmatprep.subr.bf16.mxu0 0
        %419 = vmatpush1.bf16.xpose.msra.mxu0 0
        %420 = vmatprep.subr.bf16.mxu0 0
        %421 = vmatpush1.bf16.xpose.msra.mxu0 0
        %422 = vmatprep.subr.bf16.mxu0 0
        %423 = vmatpush1.bf16.xpose.msra.mxu0 0
        %424 = vmatprep.subr.bf16.mxu0 0
        %425 = vmatpush1.bf16.xpose.msra.mxu0 0
        %426 = vmatprep.subr.bf16.mxu0 0
        %427 = vmatpush1.bf16.xpose.msra.mxu0 0
        %428 = vmatprep.subr.bf16.mxu0 0
        %429 = vmatpush1.bf16.xpose.msra.mxu0 0
        %430 = vmatprep.subr.bf16.mxu0 0
        %431 = vmatpush1.bf16.xpose.msra.mxu0 0
        %432 = vmatprep.subr.bf16.mxu0 0
        %433 = vmatpush1.bf16.xpose.msra.mxu0 0
        %434 = vmatprep.subr.bf16.mxu0 0
        %435 = vmatpush1.bf16.xpose.msra.mxu0 0
        %436 = vmatprep.subr.bf16.mxu0 0
        %437 = vmatpush1.bf16.xpose.msra.mxu0 0
        %438 = vmatprep.subr.bf16.mxu0 0
        %439 = vmatpush1.bf16.xpose.msra.mxu0 0
        %440 = vmatprep.mubr.bf16.mxu0 0
        %441 = vmatmul.mubr.bf16.gmra.mrb[0].mxu0 %v403
        %v442 = vpop.f32.mrb[0].mxu0
        %v443 = vadd.f32 0.0, %v442
        %v444 = vpop.f32.mrb[0].mxu0
        %v445 = vpop.f32.mrb[0].mxu0
        %v446 = vpop.f32.mrb[0].mxu0
        %447 = vdwg.mxu0
        %v448 = vsel %vm401, %v443, -inf
        %449 = vmax.xlane.f32.xlu0 %v448
        %v450 = vpop.xlane.xlu0 %449
        %v451 = vsub.f32 %v443, %v450
        %v452 = vmul.f32 %v451, 1.442695
        %v453 = vpow.pop %v452
        %v454 = vsel %vm401, %v453, 0.0
        %455 = vadd.xlane.f32.xlu0 %v454
        %v456 = vpop.xlane.xlu0 %455
        %v457 = vrcp.pop %v456
        %v458 = vmul.f32 %v453, %v457
        %v459 = vpack.c.bf16 %v458, %v458
        %460 = vrot.lane.b32.xlu0 %v397, 64
        %v461 = vpop.permute.xlu0 %460
        %v463 = vsel %vm401, %v459, 0
        %vm465 = vcmask 1043456
        %v467 = vsel %vm465, %v461, 0
        %469 = vmatprep.subr.bf16.mxu0 0
        %470 = vmatpush1.bf16.msra.mxu0 %v467
        %471 = vmatprep.subr.bf16.mxu0 0
        %472 = vmatpush1.bf16.msra.mxu0 0
        %473 = vmatprep.subr.bf16.mxu0 0
        %474 = vmatpush1.bf16.msra.mxu0 0
        %475 = vmatprep.subr.bf16.mxu0 0
        %476 = vmatpush1.bf16.msra.mxu0 0
        %477 = vmatprep.subr.bf16.mxu0 0
        %478 = vmatpush1.bf16.msra.mxu0 0
        %479 = vmatprep.subr.bf16.mxu0 0
        %480 = vmatpush1.bf16.msra.mxu0 0
        %481 = vmatprep.subr.bf16.mxu0 0
        %482 = vmatpush1.bf16.msra.mxu0 0
        %483 = vmatprep.subr.bf16.mxu0 0
        %484 = vmatpush1.bf16.msra.mxu0 0
        %485 = vmatprep.subr.bf16.mxu0 0
        %486 = vmatpush1.bf16.msra.mxu0 0
        %487 = vmatprep.subr.bf16.mxu0 0
        %488 = vmatpush1.bf16.msra.mxu0 0
        %489 = vmatprep.subr.bf16.mxu0 0
        %490 = vmatpush1.bf16.msra.mxu0 0
        %491 = vmatprep.subr.bf16.mxu0 0
        %492 = vmatpush1.bf16.msra.mxu0 0
        %493 = vmatprep.subr.bf16.mxu0 0
        %494 = vmatpush1.bf16.msra.mxu0 0
        %495 = vmatprep.subr.bf16.mxu0 0
        %496 = vmatpush1.bf16.msra.mxu0 0
        %497 = vmatprep.subr.bf16.mxu0 0
        %498 = vmatpush1.bf16.msra.mxu0 0
        %499 = vmatprep.subr.bf16.mxu0 0
        %500 = vmatpush1.bf16.msra.mxu0 0
        %501 = vmatprep.mubr.bf16.mxu0 0
        %502 = vmatmul.mubr.bf16.gmra.mrb[0].mxu0 %v463
        %v503 = vpop.f32.mrb[0].mxu0
        %v504 = vadd.f32 0.0, %v503
        %v505 = vpop.f32.mrb[0].mxu0
        %v506 = vpop.f32.mrb[0].mxu0
        %v507 = vpop.f32.mrb[0].mxu0
        %508 = vdwg.mxu0
        %v509 = vpack.c.bf16 %v504, %v504
        %v510 = vld [vmem:[#allocation7] sm:$0xf]
        %511 = vrot.lane.b32.xlu0 %v397, 120
        %v512 = vpop.permute.xlu0 %511
        %513 = vrot.lane.b32.xlu0 %v397, 88
        %v514 = vpop.permute.xlu0 %513
        %v516 = vsel %vm401, %v512, 0
        %v519 = vsel %vm401, %v514, 0
        %521 = vmatprep.subr.bf16.mxu0 0
        %522 = vmatpush1.bf16.xpose.msra.mxu0 %v519
        %523 = vmatprep.subr.bf16.mxu0 0
        %524 = vmatpush1.bf16.xpose.msra.mxu0 0
        %525 = vmatprep.subr.bf16.mxu0 0
        %526 = vmatpush1.bf16.xpose.msra.mxu0 0
        %527 = vmatprep.subr.bf16.mxu0 0
        %528 = vmatpush1.bf16.xpose.msra.mxu0 0
        %529 = vmatprep.subr.bf16.mxu0 0
        %530 = vmatpush1.bf16.xpose.msra.mxu0 0
        %531 = vmatprep.subr.bf16.mxu0 0
        %532 = vmatpush1.bf16.xpose.msra.mxu0 0
        %533 = vmatprep.subr.bf16.mxu0 0
        %534 = vmatpush1.bf16.xpose.msra.mxu0 0
        %535 = vmatprep.subr.bf16.mxu0 0
        %536 = vmatpush1.bf16.xpose.msra.mxu0 0
        %537 = vmatprep.subr.bf16.mxu0 0
        %538 = vmatpush1.bf16.xpose.msra.mxu0 0
        %539 = vmatprep.subr.bf16.mxu0 0
        %540 = vmatpush1.bf16.xpose.msra.mxu0 0
        %541 = vmatprep.subr.bf16.mxu0 0
        %542 = vmatpush1.bf16.xpose.msra.mxu0 0
        %543 = vmatprep.subr.bf16.mxu0 0
        %544 = vmatpush1.bf16.xpose.msra.mxu0 0
        %545 = vmatprep.subr.bf16.mxu0 0
        %546 = vmatpush1.bf16.xpose.msra.mxu0 0
        %547 = vmatprep.subr.bf16.mxu0 0
        %548 = vmatpush1.bf16.xpose.msra.mxu0 0
        %549 = vmatprep.subr.bf16.mxu0 0
        %550 = vmatpush1.bf16.xpose.msra.mxu0 0
        %551 = vmatprep.subr.bf16.mxu0 0
        %552 = vmatpush1.bf16.xpose.msra.mxu0 0
        %553 = vmatprep.mubr.bf16.mxu0 0
        %554 = vmatmul.mubr.bf16.gmra.mrb[0].mxu0 %v516
        %v555 = vpop.f32.mrb[0].mxu0
        %v556 = vadd.f32 0.0, %v555
        %v557 = vpop.f32.mrb[0].mxu0
        %v558 = vpop.f32.mrb[0].mxu0
        %v559 = vpop.f32.mrb[0].mxu0
        %560 = vdwg.mxu0
        %v561 = vsel %vm401, %v556, -inf
        %562 = vmax.xlane.f32.xlu0 %v561
        %v563 = vpop.xlane.xlu0 %562
        %v564 = vsub.f32 %v556, %v563
        %v565 = vmul.f32 %v564, 1.442695
        %v566 = vpow.pop %v565
        %v567 = vsel %vm401, %v566, 0.0
        %568 = vadd.xlane.f32.xlu0 %v567
        %v569 = vpop.xlane.xlu0 %568
        %v570 = vrcp.pop %v569
        %v571 = vmul.f32 %v566, %v570
        %v572 = vpack.c.bf16 %v571, %v571
        %573 = vrot.lane.b32.xlu0 %v397, 56
        %v574 = vpop.permute.xlu0 %573
        %v576 = vsel %vm401, %v572, 0
        %v579 = vsel %vm465, %v574, 0
        %581 = vmatprep.subr.bf16.mxu0 0
        %582 = vmatpush1.bf16.msra.mxu0 %v579
        %583 = vmatprep.subr.bf16.mxu0 0
        %584 = vmatpush1.bf16.msra.mxu0 0
        %585 = vmatprep.subr.bf16.mxu0 0
        %586 = vmatpush1.bf16.msra.mxu0 0
        %587 = vmatprep.subr.bf16.mxu0 0
        %588 = vmatpush1.bf16.msra.mxu0 0
        %589 = vmatprep.subr.bf16.mxu0 0
        %590 = vmatpush1.bf16.msra.mxu0 0
        %591 = vmatprep.subr.bf16.mxu0 0
        %592 = vmatpush1.bf16.msra.mxu0 0
        %593 = vmatprep.subr.bf16.mxu0 0
        %594 = vmatpush1.bf16.msra.mxu0 0
        %595 = vmatprep.subr.bf16.mxu0 0
        %596 = vmatpush1.bf16.msra.mxu0 0
        %597 = vmatprep.subr.bf16.mxu0 0
        %598 = vmatpush1.bf16.msra.mxu0 0
        %599 = vmatprep.subr.bf16.mxu0 0
        %600 = vmatpush1.bf16.msra.mxu0 0
        %601 = vmatprep.subr.bf16.mxu0 0
        %602 = vmatpush1.bf16.msra.mxu0 0
        %603 = vmatprep.subr.bf16.mxu0 0
        %604 = vmatpush1.bf16.msra.mxu0 0
        %605 = vmatprep.subr.bf16.mxu0 0
        %606 = vmatpush1.bf16.msra.mxu0 0
        %607 = vmatprep.subr.bf16.mxu0 0
        %608 = vmatpush1.bf16.msra.mxu0 0
        %609 = vmatprep.subr.bf16.mxu0 0
        %610 = vmatpush1.bf16.msra.mxu0 0
        %611 = vmatprep.subr.bf16.mxu0 0
        %612 = vmatpush1.bf16.msra.mxu0 0
        %613 = vmatprep.mubr.bf16.mxu0 0
        %614 = vmatmul.mubr.bf16.gmra.mrb[0].mxu0 %v576
        %v615 = vpop.f32.mrb[0].mxu0
        %v616 = vadd.f32 0.0, %v615
        %v617 = vpop.f32.mrb[0].mxu0
        %v618 = vpop.f32.mrb[0].mxu0
        %v619 = vpop.f32.mrb[0].mxu0
        %620 = vdwg.mxu0
        %v621 = vpack.c.bf16 %v616, %v616
        %v622 = vld [vmem:[#allocation7 + $0x4] sm:$0xf]
        %v624 = vsel %vm401, %v621, 0
        %v627 = vsel %vm465, %v622, 0
        %629 = vmatprep.subr.bf16.mxu0 0
        %630 = vmatpush1.bf16.msra.mxu0 %v627
        %631 = vmatprep.subr.bf16.mxu0 0
        %632 = vmatpush1.bf16.msra.mxu0 0
        %633 = vmatprep.subr.bf16.mxu0 0
        %634 = vmatpush1.bf16.msra.mxu0 0
        %635 = vmatprep.subr.bf16.mxu0 0
        %636 = vmatpush1.bf16.msra.mxu0 0
        %637 = vmatprep.subr.bf16.mxu0 0
        %638 = vmatpush1.bf16.msra.mxu0 0
        %639 = vmatprep.subr.bf16.mxu0 0
        %640 = vmatpush1.bf16.msra.mxu0 0
        %641 = vmatprep.subr.bf16.mxu0 0
        %642 = vmatpush1.bf16.msra.mxu0 0
        %643 = vmatprep.subr.bf16.mxu0 0
        %644 = vmatpush1.bf16.msra.mxu0 0
        %645 = vmatprep.subr.bf16.mxu0 0
        %646 = vmatpush1.bf16.msra.mxu0 0
        %647 = vmatprep.subr.bf16.mxu0 0
        %648 = vmatpush1.bf16.msra.mxu0 0
        %649 = vmatprep.subr.bf16.mxu0 0
        %650 = vmatpush1.bf16.msra.mxu0 0
        %651 = vmatprep.subr.bf16.mxu0 0
        %652 = vmatpush1.bf16.msra.mxu0 0
        %653 = vmatprep.subr.bf16.mxu0 0
        %654 = vmatpush1.bf16.msra.mxu0 0
        %655 = vmatprep.subr.bf16.mxu0 0
        %656 = vmatpush1.bf16.msra.mxu0 0
        %657 = vmatprep.subr.bf16.mxu0 0
        %658 = vmatpush1.bf16.msra.mxu0 0
        %659 = vmatprep.subr.bf16.mxu0 0
        %660 = vmatpush1.bf16.msra.mxu0 0
        %661 = vmatprep.mubr.bf16.mxu0 0
        %662 = vmatmul.mubr.bf16.gmra.mrb[0].mxu0 %v624
        %v663 = vpop.f32.mrb[0].mxu0
        %v664 = vadd.f32 0.0, %v663
        %v665 = vpop.f32.mrb[0].mxu0
        %v666 = vpop.f32.mrb[0].mxu0
        %v667 = vpop.f32.mrb[0].mxu0
        %668 = vdwg.mxu0
        %v670 = vsel %vm401, %v509, 0
        %v673 = vsel %vm465, %v510, 0
        %675 = vmatprep.subr.bf16.mxu0 0
        %676 = vmatpush1.bf16.msra.mxu0 %v673
        %677 = vmatprep.subr.bf16.mxu0 0
        %678 = vmatpush1.bf16.msra.mxu0 0
        %679 = vmatprep.subr.bf16.mxu0 0
        %680 = vmatpush1.bf16.msra.mxu0 0
        %681 = vmatprep.subr.bf16.mxu0 0
        %682 = vmatpush1.bf16.msra.mxu0 0
        %683 = vmatprep.subr.bf16.mxu0 0
        %684 = vmatpush1.bf16.msra.mxu0 0
        %685 = vmatprep.subr.bf16.mxu0 0
        %686 = vmatpush1.bf16.msra.mxu0 0
        %687 = vmatprep.subr.bf16.mxu0 0
        %688 = vmatpush1.bf16.msra.mxu0 0
        %689 = vmatprep.subr.bf16.mxu0 0
        %690 = vmatpush1.bf16.msra.mxu0 0
        %691 = vmatprep.subr.bf16.mxu0 0
        %692 = vmatpush1.bf16.msra.mxu0 0
        %693 = vmatprep.subr.bf16.mxu0 0
        %694 = vmatpush1.bf16.msra.mxu0 0
        %695 = vmatprep.subr.bf16.mxu0 0
        %696 = vmatpush1.bf16.msra.mxu0 0
        %697 = vmatprep.subr.bf16.mxu0 0
        %698 = vmatpush1.bf16.msra.mxu0 0
        %699 = vmatprep.subr.bf16.mxu0 0
        %700 = vmatpush1.bf16.msra.mxu0 0
        %701 = vmatprep.subr.bf16.mxu0 0
        %702 = vmatpush1.bf16.msra.mxu0 0
        %703 = vmatprep.subr.bf16.mxu0 0
        %704 = vmatpush1.bf16.msra.mxu0 0
        %705 = vmatprep.subr.bf16.mxu0 0
        %706 = vmatpush1.bf16.msra.mxu0 0
        %707 = vmatprep.mubr.bf16.mxu0 0
        %708 = vmatmul.mubr.bf16.gmra.mrb[0].mxu0 %v670
        %v709 = vpop.f32.mrb[0].mxu0
        %v710 = vadd.f32 %v664, %v709
        %v711 = vpop.f32.mrb[0].mxu0
        %v712 = vpop.f32.mrb[0].mxu0
        %v713 = vpop.f32.mrb[0].mxu0
        %714 = vdwg.mxu0
        %715 = vrot.lane.b32.xlu0 %v397, 112
        %v716 = vpop.permute.xlu0 %715
        %717 = vrot.lane.b32.xlu0 %v397, 80
        %v718 = vpop.permute.xlu0 %717
        %v720 = vsel %vm401, %v716, 0
        %v723 = vsel %vm401, %v718, 0
        %725 = vmatprep.subr.bf16.mxu0 0
        %726 = vmatpush1.bf16.xpose.msra.mxu0 %v723
        %727 = vmatprep.subr.bf16.mxu0 0
        %728 = vmatpush1.bf16.xpose.msra.mxu0 0
        %729 = vmatprep.subr.bf16.mxu0 0
        %730 = vmatpush1.bf16.xpose.msra.mxu0 0
        %731 = vmatprep.subr.bf16.mxu0 0
        %732 = vmatpush1.bf16.xpose.msra.mxu0 0
        %733 = vmatprep.subr.bf16.mxu0 0
        %734 = vmatpush1.bf16.xpose.msra.mxu0 0
        %735 = vmatprep.subr.bf16.mxu0 0
        %736 = vmatpush1.bf16.xpose.msra.mxu0 0
        %737 = vmatprep.subr.bf16.mxu0 0
        %738 = vmatpush1.bf16.xpose.msra.mxu0 0
        %739 = vmatprep.subr.bf16.mxu0 0
        %740 = vmatpush1.bf16.xpose.msra.mxu0 0
        %741 = vmatprep.subr.bf16.mxu0 0
        %742 = vmatpush1.bf16.xpose.msra.mxu0 0
        %743 = vmatprep.subr.bf16.mxu0 0
        %744 = vmatpush1.bf16.xpose.msra.mxu0 0
        %745 = vmatprep.subr.bf16.mxu0 0
        %746 = vmatpush1.bf16.xpose.msra.mxu0 0
        %747 = vmatprep.subr.bf16.mxu0 0
        %748 = vmatpush1.bf16.xpose.msra.mxu0 0
        %749 = vmatprep.subr.bf16.mxu0 0
        %750 = vmatpush1.bf16.xpose.msra.mxu0 0
        %751 = vmatprep.subr.bf16.mxu0 0
        %752 = vmatpush1.bf16.xpose.msra.mxu0 0
        %753 = vmatprep.subr.bf16.mxu0 0
        %754 = vmatpush1.bf16.xpose.msra.mxu0 0
        %755 = vmatprep.subr.bf16.mxu0 0
        %756 = vmatpush1.bf16.xpose.msra.mxu0 0
        %757 = vmatprep.mubr.bf16.mxu0 0
        %758 = vmatmul.mubr.bf16.gmra.mrb[0].mxu0 %v720
        %v759 = vpop.f32.mrb[0].mxu0
        %v760 = vadd.f32 0.0, %v759
        %v761 = vpop.f32.mrb[0].mxu0
        %v762 = vpop.f32.mrb[0].mxu0
        %v763 = vpop.f32.mrb[0].mxu0
        %764 = vdwg.mxu0
        %v765 = vsel %vm401, %v760, -inf
        %766 = vmax.xlane.f32.xlu0 %v765
        %v767 = vpop.xlane.xlu0 %766
        %v768 = vsub.f32 %v760, %v767
        %v769 = vmul.f32 %v768, 1.442695
        %v770 = vpow.pop %v769
        %v771 = vsel %vm401, %v770, 0.0
        %772 = vadd.xlane.f32.xlu0 %v771
        %v773 = vpop.xlane.xlu0 %772
        %v774 = vrcp.pop %v773
        %v775 = vmul.f32 %v770, %v774
        %v776 = vpack.c.bf16 %v775, %v775
        %777 = vrot.lane.b32.xlu0 %v397, 48
        %v778 = vpop.permute.xlu0 %777
        %v780 = vsel %vm401, %v776, 0
        %v783 = vsel %vm465, %v778, 0
        %785 = vmatprep.subr.bf16.mxu0 0
        %786 = vmatpush1.bf16.msra.mxu0 %v783
        %787 = vmatprep.subr.bf16.mxu0 0
        %788 = vmatpush1.bf16.msra.mxu0 0
        %789 = vmatprep.subr.bf16.mxu0 0
        %790 = vmatpush1.bf16.msra.mxu0 0
        %791 = vmatprep.subr.bf16.mxu0 0
        %792 = vmatpush1.bf16.msra.mxu0 0
        %793 = vmatprep.subr.bf16.mxu0 0
        %794 = vmatpush1.bf16.msra.mxu0 0
        %795 = vmatprep.subr.bf16.mxu0 0
        %796 = vmatpush1.bf16.msra.mxu0 0
        %797 = vmatprep.subr.bf16.mxu0 0
        %798 = vmatpush1.bf16.msra.mxu0 0
        %799 = vmatprep.subr.bf16.mxu0 0
        %800 = vmatpush1.bf16.msra.mxu0 0
        %801 = vmatprep.subr.bf16.mxu0 0
        %802 = vmatpush1.bf16.msra.mxu0 0
        %803 = vmatprep.subr.bf16.mxu0 0
        %804 = vmatpush1.bf16.msra.mxu0 0
        %805 = vmatprep.subr.bf16.mxu0 0
        %806 = vmatpush1.bf16.msra.mxu0 0
        %807 = vmatprep.subr.bf16.mxu0 0
        %808 = vmatpush1.bf16.msra.mxu0 0
        %809 = vmatprep.subr.bf16.mxu0 0
        %810 = vmatpush1.bf16.msra.mxu0 0
        %811 = vmatprep.subr.bf16.mxu0 0
        %812 = vmatpush1.bf16.msra.mxu0 0
        %813 = vmatprep.subr.bf16.mxu0 0
        %814 = vmatpush1.bf16.msra.mxu0 0
        %815 = vmatprep.subr.bf16.mxu0 0
        %816 = vmatpush1.bf16.msra.mxu0 0
        %817 = vmatprep.mubr.bf16.mxu0 0
        %818 = vmatmul.mubr.bf16.gmra.mrb[0].mxu0 %v780
        %v819 = vpop.f32.mrb[0].mxu0
        %v820 = vadd.f32 0.0, %v819
        %v821 = vpop.f32.mrb[0].mxu0
        %v822 = vpop.f32.mrb[0].mxu0
        %v823 = vpop.f32.mrb[0].mxu0
        %824 = vdwg.mxu0
        %v825 = vpack.c.bf16 %v820, %v820
        %v826 = vld [vmem:[#allocation7 + $0x8] sm:$0xf]
        %v828 = vsel %vm401, %v825, 0
        %v831 = vsel %vm465, %v826, 0
        %833 = vmatprep.subr.bf16.mxu0 0
        %834 = vmatpush1.bf16.msra.mxu0 %v831
        %835 = vmatprep.subr.bf16.mxu0 0
        %836 = vmatpush1.bf16.msra.mxu0 0
        %837 = vmatprep.subr.bf16.mxu0 0
        %838 = vmatpush1.bf16.msra.mxu0 0
        %839 = vmatprep.subr.bf16.mxu0 0
        %840 = vmatpush1.bf16.msra.mxu0 0
        %841 = vmatprep.subr.bf16.mxu0 0
        %842 = vmatpush1.bf16.msra.mxu0 0
        %843 = vmatprep.subr.bf16.mxu0 0
        %844 = vmatpush1.bf16.msra.mxu0 0
        %845 = vmatprep.subr.bf16.mxu0 0
        %846 = vmatpush1.bf16.msra.mxu0 0
        %847 = vmatprep.subr.bf16.mxu0 0
        %848 = vmatpush1.bf16.msra.mxu0 0
        %849 = vmatprep.subr.bf16.mxu0 0
        %850 = vmatpush1.bf16.msra.mxu0 0
        %851 = vmatprep.subr.bf16.mxu0 0
        %852 = vmatpush1.bf16.msra.mxu0 0
        %853 = vmatprep.subr.bf16.mxu0 0
        %854 = vmatpush1.bf16.msra.mxu0 0
        %855 = vmatprep.subr.bf16.mxu0 0
        %856 = vmatpush1.bf16.msra.mxu0 0
        %857 = vmatprep.subr.bf16.mxu0 0
        %858 = vmatpush1.bf16.msra.mxu0 0
        %859 = vmatprep.subr.bf16.mxu0 0
        %860 = vmatpush1.bf16.msra.mxu0 0
        %861 = vmatprep.subr.bf16.mxu0 0
        %862 = vmatpush1.bf16.msra.mxu0 0
        %863 = vmatprep.subr.bf16.mxu0 0
        %864 = vmatpush1.bf16.msra.mxu0 0
        %865 = vmatprep.mubr.bf16.mxu0 0
        %866 = vmatmul.mubr.bf16.gmra.mrb[0].mxu0 %v828
        %v867 = vpop.f32.mrb[0].mxu0
        %v868 = vadd.f32 0.0, %v867
        %v869 = vpop.f32.mrb[0].mxu0
        %v870 = vpop.f32.mrb[0].mxu0
        %v871 = vpop.f32.mrb[0].mxu0
        %872 = vdwg.mxu0
        %v873 = vadd.f32 %v710, %v868
        %874 = vrot.lane.b32.xlu0 %v397, 104
        %v875 = vpop.permute.xlu0 %874
        %876 = vrot.lane.b32.xlu0 %v397, 72
        %v877 = vpop.permute.xlu0 %876
        %v879 = vsel %vm401, %v875, 0
        %v882 = vsel %vm401, %v877, 0
        %884 = vmatprep.subr.bf16.mxu0 0
        %885 = vmatpush1.bf16.xpose.msra.mxu0 %v882
        %886 = vmatprep.subr.bf16.mxu0 0
        %887 = vmatpush1.bf16.xpose.msra.mxu0 0
        %888 = vmatprep.subr.bf16.mxu0 0
        %889 = vmatpush1.bf16.xpose.msra.mxu0 0
        %890 = vmatprep.subr.bf16.mxu0 0
        %891 = vmatpush1.bf16.xpose.msra.mxu0 0
        %892 = vmatprep.subr.bf16.mxu0 0
        %893 = vmatpush1.bf16.xpose.msra.mxu0 0
        %894 = vmatprep.subr.bf16.mxu0 0
        %895 = vmatpush1.bf16.xpose.msra.mxu0 0
        %896 = vmatprep.subr.bf16.mxu0 0
        %897 = vmatpush1.bf16.xpose.msra.mxu0 0
        %898 = vmatprep.subr.bf16.mxu0 0
        %899 = vmatpush1.bf16.xpose.msra.mxu0 0
        %900 = vmatprep.subr.bf16.mxu0 0
        %901 = vmatpush1.bf16.xpose.msra.mxu0 0
        %902 = vmatprep.subr.bf16.mxu0 0
        %903 = vmatpush1.bf16.xpose.msra.mxu0 0
        %904 = vmatprep.subr.bf16.mxu0 0
        %905 = vmatpush1.bf16.xpose.msra.mxu0 0
        %906 = vmatprep.subr.bf16.mxu0 0
        %907 = vmatpush1.bf16.xpose.msra.mxu0 0
        %908 = vmatprep.subr.bf16.mxu0 0
        %909 = vmatpush1.bf16.xpose.msra.mxu0 0
        %910 = vmatprep.subr.bf16.mxu0 0
        %911 = vmatpush1.bf16.xpose.msra.mxu0 0
        %912 = vmatprep.subr.bf16.mxu0 0
        %913 = vmatpush1.bf16.xpose.msra.mxu0 0
        %914 = vmatprep.subr.bf16.mxu0 0
        %915 = vmatpush1.bf16.xpose.msra.mxu0 0
        %916 = vmatprep.mubr.bf16.mxu0 0
        %917 = vmatmul.mubr.bf16.gmra.mrb[0].mxu0 %v879
        %v918 = vpop.f32.mrb[0].mxu0
        %v919 = vadd.f32 0.0, %v918
        %v920 = vpop.f32.mrb[0].mxu0
        %v921 = vpop.f32.mrb[0].mxu0
        %v922 = vpop.f32.mrb[0].mxu0
        %923 = vdwg.mxu0
        %v924 = vsel %vm401, %v919, -inf
        %925 = vmax.xlane.f32.xlu0 %v924
        %v926 = vpop.xlane.xlu0 %925
        %v927 = vsub.f32 %v919, %v926
        %v928 = vmul.f32 %v927, 1.442695
        %v929 = vpow.pop %v928
        %v930 = vsel %vm401, %v929, 0.0
        %931 = vadd.xlane.f32.xlu0 %v930
        %v932 = vpop.xlane.xlu0 %931
        %v933 = vrcp.pop %v932
        %v934 = vmul.f32 %v929, %v933
        %v935 = vpack.c.bf16 %v934, %v934
        %936 = vrot.lane.b32.xlu0 %v397, 40
        %v937 = vpop.permute.xlu0 %936
        %v939 = vsel %vm401, %v935, 0
        %v942 = vsel %vm465, %v937, 0
        %944 = vmatprep.subr.bf16.mxu0 0
        %945 = vmatpush1.bf16.msra.mxu0 %v942
        %946 = vmatprep.subr.bf16.mxu0 0
        %947 = vmatpush1.bf16.msra.mxu0 0
        %948 = vmatprep.subr.bf16.mxu0 0
        %949 = vmatpush1.bf16.msra.mxu0 0
        %950 = vmatprep.subr.bf16.mxu0 0
        %951 = vmatpush1.bf16.msra.mxu0 0
        %952 = vmatprep.subr.bf16.mxu0 0
        %953 = vmatpush1.bf16.msra.mxu0 0
        %954 = vmatprep.subr.bf16.mxu0 0
        %955 = vmatpush1.bf16.msra.mxu0 0
        %956 = vmatprep.subr.bf16.mxu0 0
        %957 = vmatpush1.bf16.msra.mxu0 0
        %958 = vmatprep.subr.bf16.mxu0 0
        %959 = vmatpush1.bf16.msra.mxu0 0
        %960 = vmatprep.subr.bf16.mxu0 0
        %961 = vmatpush1.bf16.msra.mxu0 0
        %962 = vmatprep.subr.bf16.mxu0 0
        %963 = vmatpush1.bf16.msra.mxu0 0
        %964 = vmatprep.subr.bf16.mxu0 0
        %965 = vmatpush1.bf16.msra.mxu0 0
        %966 = vmatprep.subr.bf16.mxu0 0
        %967 = vmatpush1.bf16.msra.mxu0 0
        %968 = vmatprep.subr.bf16.mxu0 0
        %969 = vmatpush1.bf16.msra.mxu0 0
        %970 = vmatprep.subr.bf16.mxu0 0
        %971 = vmatpush1.bf16.msra.mxu0 0
        %972 = vmatprep.subr.bf16.mxu0 0
        %973 = vmatpush1.bf16.msra.mxu0 0
        %974 = vmatprep.subr.bf16.mxu0 0
        %975 = vmatpush1.bf16.msra.mxu0 0
        %976 = vmatprep.mubr.bf16.mxu0 0
        %977 = vmatmul.mubr.bf16.gmra.mrb[0].mxu0 %v939
        %v978 = vpop.f32.mrb[0].mxu0
        %v979 = vadd.f32 0.0, %v978
        %v980 = vpop.f32.mrb[0].mxu0
        %v981 = vpop.f32.mrb[0].mxu0
        %v982 = vpop.f32.mrb[0].mxu0
        %983 = vdwg.mxu0
        %v984 = vpack.c.bf16 %v979, %v979
        %v985 = vld [vmem:[#allocation7 + $0xc] sm:$0xf]
        %v987 = vsel %vm401, %v984, 0
        %v990 = vsel %vm465, %v985, 0
        %992 = vmatprep.subr.bf16.mxu0 0
        %993 = vmatpush1.bf16.msra.mxu0 %v990
        %994 = vmatprep.subr.bf16.mxu0 0
        %995 = vmatpush1.bf16.msra.mxu0 0
        %996 = vmatprep.subr.bf16.mxu0 0
        %997 = vmatpush1.bf16.msra.mxu0 0
        %998 = vmatprep.subr.bf16.mxu0 0
        %999 = vmatpush1.bf16.msra.mxu0 0
        %1000 = vmatprep.subr.bf16.mxu0 0
        %1001 = vmatpush1.bf16.msra.mxu0 0
        %1002 = vmatprep.subr.bf16.mxu0 0
        %1003 = vmatpush1.bf16.msra.mxu0 0
        %1004 = vmatprep.subr.bf16.mxu0 0
        %1005 = vmatpush1.bf16.msra.mxu0 0
        %1006 = vmatprep.subr.bf16.mxu0 0
        %1007 = vmatpush1.bf16.msra.mxu0 0
        %1008 = vmatprep.subr.bf16.mxu0 0
        %1009 = vmatpush1.bf16.msra.mxu0 0
        %1010 = vmatprep.subr.bf16.mxu0 0
        %1011 = vmatpush1.bf16.msra.mxu0 0
        %1012 = vmatprep.subr.bf16.mxu0 0
        %1013 = vmatpush1.bf16.msra.mxu0 0
        %1014 = vmatprep.subr.bf16.mxu0 0
        %1015 = vmatpush1.bf16.msra.mxu0 0
        %1016 = vmatprep.subr.bf16.mxu0 0
        %1017 = vmatpush1.bf16.msra.mxu0 0
        %1018 = vmatprep.subr.bf16.mxu0 0
        %1019 = vmatpush1.bf16.msra.mxu0 0
        %1020 = vmatprep.subr.bf16.mxu0 0
        %1021 = vmatpush1.bf16.msra.mxu0 0
        %1022 = vmatprep.subr.bf16.mxu0 0
        %1023 = vmatpush1.bf16.msra.mxu0 0
        %1024 = vmatprep.mubr.bf16.mxu0 0
        %1025 = vmatmul.mubr.bf16.gmra.mrb[0].mxu0 %v987
        %v1026 = vpop.f32.mrb[0].mxu0
        %v1027 = vadd.f32 0.0, %v1026
        %v1028 = vpop.f32.mrb[0].mxu0
        %v1029 = vpop.f32.mrb[0].mxu0
        %v1030 = vpop.f32.mrb[0].mxu0
        %1031 = vdwg.mxu0
        %v1032 = vadd.f32 %v873, %v1027
        %v1033 = vld [vmem:[%s5] sm:$0x1]
        %v1035 = vlaneseq
        %v1036 = vshrl.u32 %v1035, 7
        %v1037 = vsub.s32 0, %v1036
        %v1038 = vrot.slane %v1033, %v1037
        %v1040 = vadd.f32 %v1032, %v1038
        %v1041 = vadd.f32 %v297, %v1040
        %1042 = vst.msk [vmem:[%s295] sm:$0xff] %vm300, %v1041
        %s1043 = sand.u32 %s163, 1
        %s1044 = scalar_lea.sflag [#allocation4], %s1043
        %s1045 = sand.u32 %s163, 1
        %s1046 = smul.addr %s1045, 8
        %s1047 = scalar_lea.vmem [#allocation8], %s1046
        // Predicated region
        $region57: #{tpu_custom_call.1} parent=43 // pred_check
          %p1048 = pneg %p173
        $region58: #{tpu_custom_call.1} parent=43 // pred_check_branch
          %1050 = sbr.rel (%p1048) target = $region60
        $region59: #{tpu_custom_call.1} parent=43 // pred_region
          %s1052 = ssub.s32 128, 128
          %1053 = vsyncadd %s1044, %s1052
          %s1054 = smul.addr %s24, 128
          %s1055 = scalar_lea.hbm %s6, %s1054
          %s1057 = sshll.u32 %s1047, 4
          %s1058 = int_to_ptr.vmem [resolvable:$true] %s1057
          %1060 = dma.vmem_to_hbm [thread:$0]  %s1058, 128, %s1055, %s1044
        $region60: #{tpu_custom_call.1} parent=43 // pred_fallthru
          _
      $region44: #{tpu_custom_call.1} parent=5 // pred_fallthru
        _
      %p1061 = scmp.le.s32.totalorder 2, %s19
      // Predicated region
      $region61: #{tpu_custom_call.1} parent=5 // pred_check
        %p1062 = pneg %p1061
      $region62: #{tpu_custom_call.1} parent=5 // pred_check_branch
        %1064 = sbr.rel (%p1062) target = $region64
      $region63: #{tpu_custom_call.1} parent=5 // pred_region
        %s1065 = ssub.s32 %s19, 2
        // Predicated region
        $region65: #{tpu_custom_call.1} parent=63 // pred_check
          %p1066 = pneg %p179
        $region66: #{tpu_custom_call.1} parent=63 // pred_check_branch
          %1068 = sbr.rel (%p1066) target = $region68
        $region67: #{tpu_custom_call.1} parent=63 // pred_region
          %s1069 = sand.u32 %s164, 1
          %s1070 = scalar_lea.sflag [#allocation4], %s1069
          %s1071 = sand.u32 %s164, 1
          %s1072 = smul.addr %s1071, 8
          %s1073 = scalar_lea.vmem [#allocation8], %s1072
          %1074 = dma.done %s1070, 128
        $region68: #{tpu_custom_call.1} parent=63 // pred_fallthru
          _
      $region64: #{tpu_custom_call.1} parent=5 // pred_fallthru
        _
    $region6: #{tpu_custom_call.1} parent=1 // loop_footer
      %s23 = sadd.s32 1, %s19
    $region7: #{tpu_custom_call.1} parent=1 // loop_footer_branch
      %18 = sbr.rel target = $region3
    $region8: #{tpu_custom_call.1} parent=1 // loop_exit
      _
    %1075 = vsyncpa [#allocation3], 1
    %s1076 = scalar_lea.sflag [#allocation3], 1
    %1077 = vsyncpa %s1076, 1
    %1078 = vsyncpa [#allocation6], 1
    %1079 = vsyncpa [#allocation4], 1
    %s1080 = scalar_lea.sflag [#allocation4], 1
    %1081 = vsyncpa %s1080, 1

</llo_original>
